<compile_context>
chip_gen: v6e
topology: v6e:2x2x1
jax: 0.10.0
libtpu: 0.0.40
codegen_flags: <defaults>
</compile_context>

<pallas_src>
import jax
import jax.numpy as jnp
import numpy as np
from jax.experimental import pallas as pl
from jax.experimental.pallas import tpu as pltpu  # noqa: F401  (TPU backend)

EPS = 1e-5


# ----------------------------- math helpers --------------------------------

def _softplus(x):
    # torch.nn.Softplus(beta=1, threshold=20)
    return jnp.where(x > 20.0, x, jnp.log(1.0 + jnp.exp(jnp.minimum(x, 20.0))))


def _sigmoid(x):
    return 1.0 / (1.0 + jnp.exp(-x))


def _batchnorm(y, gamma, beta):
    # training-mode BatchNorm1d: batch stats over rows, biased variance.
    mu = jnp.mean(y, axis=0, keepdims=True)
    var = jnp.mean((y - mu) * (y - mu), axis=0, keepdims=True)
    return (y - mu) * jax.lax.rsqrt(var + EPS) * gamma + beta


def _bf16_dot(x, w):
    # bf16 inputs, f32 accumulation: 2x MXU throughput on v6e/v7x.
    return jnp.dot(x.astype(jnp.bfloat16), w.astype(jnp.bfloat16),
                   preferred_element_type=jnp.float32)


# ------------------------------ fused kernel -------------------------------

def _filter_layer_kernel(x_ref, w1_ref, b1_ref, g1_ref, be1_ref,
                         w2_ref, b2_ref, g2_ref, be2_ref,
                         g3_ref, be3_ref, o_ref):
    f = o_ref.shape[1]
    x = x_ref[...]

    # lin1 + bn1 (training-mode batch stats)
    fc = _bf16_dot(x, w1_ref[...]) + b1_ref[...]
    fc = _batchnorm(fc, g1_ref[...], be1_ref[...])

    # chunk(2, dim=1): static lane-slices (2F = 256 -> two 128-lane halves)
    filt = fc[:, :f]
    core = fc[:, f:]

    out = _sigmoid(filt) * _softplus(core)
    out = _batchnorm(out, g2_ref[...], be2_ref[...])

    # lin2 -> bn2 (same affine params, fresh batch stats) -> softplus
    out = _bf16_dot(out, w2_ref[...]) + b2_ref[...]
    out = _softplus(_batchnorm(out, g2_ref[...], be2_ref[...]))

    # bn3
    o_ref[...] = _batchnorm(out, g3_ref[...], be3_ref[...])


# ------------------------------ pallas wrapper ------------------------------

def _fullspec(shape):
    # whole array resident in VMEM, grid-less call
    return pl.BlockSpec(shape, lambda *_: (0,) * len(shape))


def filter_layer(fea, p):
    n = fea.shape[0]
    f = p["W2"].shape[1]
    args = (
        fea,
        p["W1"], p["b1"].reshape(1, -1),
        p["g1"].reshape(1, -1), p["be1"].reshape(1, -1),
        p["W2"], p["b2"].reshape(1, -1),
        p["g2"].reshape(1, -1), p["be2"].reshape(1, -1),
        p["g3"].reshape(1, -1), p["be3"].reshape(1, -1),
    )
    return pl.pallas_call(
        _filter_layer_kernel,
        out_shape=jax.ShapeDtypeStruct((n, f), jnp.float32),
        in_specs=[_fullspec(a.shape) for a in args],
        out_specs=_fullspec((n, f)),
    )(*args)


# ---------------------------- pure-JAX reference ----------------------------

def filter_layer_ref(fea, p):
    f = p["W2"].shape[1]
    fc = _bf16_dot(fea, p["W1"]) + p["b1"]
    fc = _batchnorm(fc, p["g1"], p["be1"])
    filt, core = fc[:, :f], fc[:, f:]
    out = _sigmoid(filt) * _softplus(core)
    out = _batchnorm(out, p["g2"], p["be2"])
    out = _bf16_dot(out, p["W2"]) + p["b2"]
    out = _softplus(_batchnorm(out, p["g2"], p["be2"]))
    return _batchnorm(out, p["g3"], p["be3"])


# ------------------------------ parameter init ------------------------------

def init_params(key, in_fea_len, out_fea_len):
    def linear(k, fin, fout):
        k1, k2 = jax.random.split(k)
        lim = 1.0 / (fin ** 0.5)
        w = jax.random.uniform(k1, (fin, fout), jnp.float32, -lim, lim)
        b = jax.random.uniform(k2, (fout,), jnp.float32, -lim, lim)
        return w, b

    k1, k2 = jax.random.split(key)
    w1, b1 = linear(k1, in_fea_len, 2 * out_fea_len)
    w2, b2 = linear(k2, out_fea_len, out_fea_len)
    # freshly-constructed nn.BatchNorm1d: gamma = 1, beta = 0
    return dict(
        W1=w1, b1=b1,
        g1=jnp.ones((2 * out_fea_len,), jnp.float32),
        be1=jnp.zeros((2 * out_fea_len,), jnp.float32),
        W2=w2, b2=b2,
        g2=jnp.ones((out_fea_len,), jnp.float32),
        be2=jnp.zeros((out_fea_len,), jnp.float32),
        g3=jnp.ones((out_fea_len,), jnp.float32),
        be3=jnp.zeros((out_fea_len,), jnp.float32),
    )


# ----------------------------------- main -----------------------------------

if __name__ == "__main__":
    key = jax.random.PRNGKey(0)
    k_fea, k_par = jax.random.split(key)

    IN_FEA_LEN = 64      # in_fea_len
    OUT_FEA_LEN = 128    # out_fea_len (lane-dense: 2F=256, F=128)
    N_ROWS = 128         # batch of rows for BatchNorm1d

    fea = jax.random.normal(k_fea, (N_ROWS, IN_FEA_LEN), jnp.float32)
    params = init_params(k_par, IN_FEA_LEN, OUT_FEA_LEN)

    out = filter_layer(fea, params)
    jax.block_until_ready(out)
    assert out.shape == (N_ROWS, OUT_FEA_LEN)

    ref = jax.jit(filter_layer_ref)(fea, params)
    jax.block_until_ready(ref)
    max_err = float(np.max(np.abs(np.asarray(out) - np.asarray(ref))))
    assert max_err < 1e-2, f"mismatch vs reference: {max_err}"

    print("KERNEL_OK")
</pallas_src>

<mosaic_0001>
module attributes {stable_mosaic.version = 11 : i64} {
  func.func @_filter_layer_kernel(%arg0: memref<128x64xf32, #tpu.memory_space<vmem>>, %arg1: memref<64x256xf32, #tpu.memory_space<vmem>>, %arg2: memref<1x256xf32, #tpu.memory_space<vmem>>, %arg3: memref<1x256xf32, #tpu.memory_space<vmem>>, %arg4: memref<1x256xf32, #tpu.memory_space<vmem>>, %arg5: memref<128x128xf32, #tpu.memory_space<vmem>>, %arg6: memref<1x128xf32, #tpu.memory_space<vmem>>, %arg7: memref<1x128xf32, #tpu.memory_space<vmem>>, %arg8: memref<1x128xf32, #tpu.memory_space<vmem>>, %arg9: memref<1x128xf32, #tpu.memory_space<vmem>>, %arg10: memref<1x128xf32, #tpu.memory_space<vmem>>, %arg11: memref<128x128xf32, #tpu.memory_space<vmem>>) attributes {dimension_semantics = [], scalar_prefetch = 0 : i64, scratch_operands = 0 : i64, tpu.core_type = #tpu.core_type<tc>} {
    %c0 = arith.constant 0 : index
    %c0_0 = arith.constant 0 : index
    %0 = vector.load %arg0[%c0, %c0_0] : memref<128x64xf32, #tpu.memory_space<vmem>>, vector<128x64xf32>
    %c0_1 = arith.constant 0 : index
    %c0_2 = arith.constant 0 : index
    %1 = vector.load %arg1[%c0_1, %c0_2] : memref<64x256xf32, #tpu.memory_space<vmem>>, vector<64x256xf32>
    %2 = arith.truncf %0 : vector<128x64xf32> to vector<128x64xbf16>
    %3 = arith.truncf %1 : vector<64x256xf32> to vector<64x256xbf16>
    %cst = arith.constant dense<0.000000e+00> : vector<128x256xf32>
    %4 = tpu.matmul %2, %3, %cst {dimension_numbers = #tpu.dot_dimension_numbers<[1], [0], [0], [1], [0, 0, 1, 1], [], []>} : vector<128x64xbf16>, vector<64x256xbf16>, vector<128x256xf32> -> vector<128x256xf32>
    %c0_3 = arith.constant 0 : index
    %c0_4 = arith.constant 0 : index
    %5 = vector.load %arg2[%c0_3, %c0_4] : memref<1x256xf32, #tpu.memory_space<vmem>>, vector<1x256xf32>
    %6 = vector.broadcast %5 : vector<1x256xf32> to vector<128x256xf32>
    %7 = arith.addf %4, %6 : vector<128x256xf32>
    %c0_5 = arith.constant 0 : index
    %c0_6 = arith.constant 0 : index
    %8 = vector.load %arg3[%c0_5, %c0_6] : memref<1x256xf32, #tpu.memory_space<vmem>>, vector<1x256xf32>
    %c0_7 = arith.constant 0 : index
    %c0_8 = arith.constant 0 : index
    %9 = vector.load %arg4[%c0_7, %c0_8] : memref<1x256xf32, #tpu.memory_space<vmem>>, vector<1x256xf32>
    %cst_9 = arith.constant dense<0.000000e+00> : vector<256xf32>
    %10 = vector.multi_reduction <add>, %7, %cst_9 [0] : vector<128x256xf32> to vector<256xf32>
    %11 = vector.shape_cast %10 : vector<256xf32> to vector<1x256xf32>
    %cst_10 = arith.constant 1.280000e+02 : f32
    %12 = vector.broadcast %cst_10 : f32 to vector<1x256xf32>
    %13 = arith.divf %11, %12 : vector<1x256xf32>
    %14 = vector.broadcast %13 : vector<1x256xf32> to vector<128x256xf32>
    %15 = arith.subf %7, %14 : vector<128x256xf32>
    %16 = vector.broadcast %13 : vector<1x256xf32> to vector<128x256xf32>
    %17 = arith.subf %7, %16 : vector<128x256xf32>
    %18 = arith.mulf %15, %17 : vector<128x256xf32>
    %cst_11 = arith.constant dense<0.000000e+00> : vector<256xf32>
    %19 = vector.multi_reduction <add>, %18, %cst_11 [0] : vector<128x256xf32> to vector<256xf32>
    %20 = vector.shape_cast %19 : vector<256xf32> to vector<1x256xf32>
    %cst_12 = arith.constant 1.280000e+02 : f32
    %21 = vector.broadcast %cst_12 : f32 to vector<1x256xf32>
    %22 = arith.divf %20, %21 : vector<1x256xf32>
    %23 = vector.broadcast %13 : vector<1x256xf32> to vector<128x256xf32>
    %24 = arith.subf %7, %23 : vector<128x256xf32>
    %cst_13 = arith.constant 9.99999974E-6 : f32
    %25 = vector.broadcast %cst_13 : f32 to vector<1x256xf32>
    %26 = arith.addf %22, %25 : vector<1x256xf32>
    %27 = math.rsqrt %26 : vector<1x256xf32>
    %28 = vector.broadcast %27 : vector<1x256xf32> to vector<128x256xf32>
    %29 = arith.mulf %24, %28 : vector<128x256xf32>
    %30 = vector.broadcast %8 : vector<1x256xf32> to vector<128x256xf32>
    %31 = arith.mulf %29, %30 : vector<128x256xf32>
    %32 = vector.broadcast %9 : vector<1x256xf32> to vector<128x256xf32>
    %33 = arith.addf %31, %32 : vector<128x256xf32>
    %34 = vector.extract_strided_slice %33 {offsets = [0, 0], sizes = [128, 128], strides = [1, 1]} : vector<128x256xf32> to vector<128x128xf32>
    %35 = vector.extract_strided_slice %33 {offsets = [0, 128], sizes = [128, 128], strides = [1, 1]} : vector<128x256xf32> to vector<128x128xf32>
    %cst_14 = arith.constant 0.000000e+00 : f32
    %36 = vector.broadcast %cst_14 : f32 to vector<128x128xf32>
    %37 = arith.subf %36, %34 : vector<128x128xf32>
    %38 = math.exp %37 : vector<128x128xf32>
    %cst_15 = arith.constant 1.000000e+00 : f32
    %39 = vector.broadcast %cst_15 : f32 to vector<128x128xf32>
    %40 = arith.addf %39, %38 : vector<128x128xf32>
    %cst_16 = arith.constant 1.000000e+00 : f32
    %41 = vector.broadcast %cst_16 : f32 to vector<128x128xf32>
    %42 = arith.divf %41, %40 : vector<128x128xf32>
    %cst_17 = arith.constant 2.000000e+01 : f32
    %43 = vector.broadcast %cst_17 : f32 to vector<128x128xf32>
    %44 = arith.cmpf ogt, %35, %43 : vector<128x128xf32>
    %cst_18 = arith.constant 2.000000e+01 : f32
    %45 = vector.broadcast %cst_18 : f32 to vector<128x128xf32>
    %46 = arith.minimumf %35, %45 : vector<128x128xf32>
    %47 = math.exp %46 : vector<128x128xf32>
    %cst_19 = arith.constant 1.000000e+00 : f32
    %48 = vector.broadcast %cst_19 : f32 to vector<128x128xf32>
    %49 = arith.addf %48, %47 : vector<128x128xf32>
    %50 = math.log %49 : vector<128x128xf32>
    %51 = arith.select %44, %35, %50 : vector<128x128xi1>, vector<128x128xf32>
    %52 = arith.mulf %42, %51 : vector<128x128xf32>
    %c0_20 = arith.constant 0 : index
    %c0_21 = arith.constant 0 : index
    %53 = vector.load %arg7[%c0_20, %c0_21] : memref<1x128xf32, #tpu.memory_space<vmem>>, vector<1x128xf32>
    %c0_22 = arith.constant 0 : index
    %c0_23 = arith.constant 0 : index
    %54 = vector.load %arg8[%c0_22, %c0_23] : memref<1x128xf32, #tpu.memory_space<vmem>>, vector<1x128xf32>
    %cst_24 = arith.constant dense<0.000000e+00> : vector<128xf32>
    %55 = vector.multi_reduction <add>, %52, %cst_24 [0] : vector<128x128xf32> to vector<128xf32>
    %56 = vector.shape_cast %55 : vector<128xf32> to vector<1x128xf32>
    %cst_25 = arith.constant 1.280000e+02 : f32
    %57 = vector.broadcast %cst_25 : f32 to vector<1x128xf32>
    %58 = arith.divf %56, %57 : vector<1x128xf32>
    %59 = vector.broadcast %58 : vector<1x128xf32> to vector<128x128xf32>
    %60 = arith.subf %52, %59 : vector<128x128xf32>
    %61 = vector.broadcast %58 : vector<1x128xf32> to vector<128x128xf32>
    %62 = arith.subf %52, %61 : vector<128x128xf32>
    %63 = arith.mulf %60, %62 : vector<128x128xf32>
    %cst_26 = arith.constant dense<0.000000e+00> : vector<128xf32>
    %64 = vector.multi_reduction <add>, %63, %cst_26 [0] : vector<128x128xf32> to vector<128xf32>
    %65 = vector.shape_cast %64 : vector<128xf32> to vector<1x128xf32>
    %cst_27 = arith.constant 1.280000e+02 : f32
    %66 = vector.broadcast %cst_27 : f32 to vector<1x128xf32>
    %67 = arith.divf %65, %66 : vector<1x128xf32>
    %68 = vector.broadcast %58 : vector<1x128xf32> to vector<128x128xf32>
    %69 = arith.subf %52, %68 : vector<128x128xf32>
    %cst_28 = arith.constant 9.99999974E-6 : f32
    %70 = vector.broadcast %cst_28 : f32 to vector<1x128xf32>
    %71 = arith.addf %67, %70 : vector<1x128xf32>
    %72 = math.rsqrt %71 : vector<1x128xf32>
    %73 = vector.broadcast %72 : vector<1x128xf32> to vector<128x128xf32>
    %74 = arith.mulf %69, %73 : vector<128x128xf32>
    %75 = vector.broadcast %53 : vector<1x128xf32> to vector<128x128xf32>
    %76 = arith.mulf %74, %75 : vector<128x128xf32>
    %77 = vector.broadcast %54 : vector<1x128xf32> to vector<128x128xf32>
    %78 = arith.addf %76, %77 : vector<128x128xf32>
    %c0_29 = arith.constant 0 : index
    %c0_30 = arith.constant 0 : index
    %79 = vector.load %arg5[%c0_29, %c0_30] : memref<128x128xf32, #tpu.memory_space<vmem>>, vector<128x128xf32>
    %80 = arith.truncf %78 : vector<128x128xf32> to vector<128x128xbf16>
    %81 = arith.truncf %79 : vector<128x128xf32> to vector<128x128xbf16>
    %cst_31 = arith.constant dense<0.000000e+00> : vector<128x128xf32>
    %82 = tpu.matmul %80, %81, %cst_31 {dimension_numbers = #tpu.dot_dimension_numbers<[1], [0], [0], [1], [0, 0, 1, 1], [], []>} : vector<128x128xbf16>, vector<128x128xbf16>, vector<128x128xf32> -> vector<128x128xf32>
    %c0_32 = arith.constant 0 : index
    %c0_33 = arith.constant 0 : index
    %83 = vector.load %arg6[%c0_32, %c0_33] : memref<1x128xf32, #tpu.memory_space<vmem>>, vector<1x128xf32>
    %84 = vector.broadcast %83 : vector<1x128xf32> to vector<128x128xf32>
    %85 = arith.addf %82, %84 : vector<128x128xf32>
    %c0_34 = arith.constant 0 : index
    %c0_35 = arith.constant 0 : index
    %86 = vector.load %arg7[%c0_34, %c0_35] : memref<1x128xf32, #tpu.memory_space<vmem>>, vector<1x128xf32>
    %c0_36 = arith.constant 0 : index
    %c0_37 = arith.constant 0 : index
    %87 = vector.load %arg8[%c0_36, %c0_37] : memref<1x128xf32, #tpu.memory_space<vmem>>, vector<1x128xf32>
    %cst_38 = arith.constant dense<0.000000e+00> : vector<128xf32>
    %88 = vector.multi_reduction <add>, %85, %cst_38 [0] : vector<128x128xf32> to vector<128xf32>
    %89 = vector.shape_cast %88 : vector<128xf32> to vector<1x128xf32>
    %cst_39 = arith.constant 1.280000e+02 : f32
    %90 = vector.broadcast %cst_39 : f32 to vector<1x128xf32>
    %91 = arith.divf %89, %90 : vector<1x128xf32>
    %92 = vector.broadcast %91 : vector<1x128xf32> to vector<128x128xf32>
    %93 = arith.subf %85, %92 : vector<128x128xf32>
    %94 = vector.broadcast %91 : vector<1x128xf32> to vector<128x128xf32>
    %95 = arith.subf %85, %94 : vector<128x128xf32>
    %96 = arith.mulf %93, %95 : vector<128x128xf32>
    %cst_40 = arith.constant dense<0.000000e+00> : vector<128xf32>
    %97 = vector.multi_reduction <add>, %96, %cst_40 [0] : vector<128x128xf32> to vector<128xf32>
    %98 = vector.shape_cast %97 : vector<128xf32> to vector<1x128xf32>
    %cst_41 = arith.constant 1.280000e+02 : f32
    %99 = vector.broadcast %cst_41 : f32 to vector<1x128xf32>
    %100 = arith.divf %98, %99 : vector<1x128xf32>
    %101 = vector.broadcast %91 : vector<1x128xf32> to vector<128x128xf32>
    %102 = arith.subf %85, %101 : vector<128x128xf32>
    %cst_42 = arith.constant 9.99999974E-6 : f32
    %103 = vector.broadcast %cst_42 : f32 to vector<1x128xf32>
    %104 = arith.addf %100, %103 : vector<1x128xf32>
    %105 = math.rsqrt %104 : vector<1x128xf32>
    %106 = vector.broadcast %105 : vector<1x128xf32> to vector<128x128xf32>
    %107 = arith.mulf %102, %106 : vector<128x128xf32>
    %108 = vector.broadcast %86 : vector<1x128xf32> to vector<128x128xf32>
    %109 = arith.mulf %107, %108 : vector<128x128xf32>
    %110 = vector.broadcast %87 : vector<1x128xf32> to vector<128x128xf32>
    %111 = arith.addf %109, %110 : vector<128x128xf32>
    %cst_43 = arith.constant 2.000000e+01 : f32
    %112 = vector.broadcast %cst_43 : f32 to vector<128x128xf32>
    %113 = arith.cmpf ogt, %111, %112 : vector<128x128xf32>
    %cst_44 = arith.constant 2.000000e+01 : f32
    %114 = vector.broadcast %cst_44 : f32 to vector<128x128xf32>
    %115 = arith.minimumf %111, %114 : vector<128x128xf32>
    %116 = math.exp %115 : vector<128x128xf32>
    %cst_45 = arith.constant 1.000000e+00 : f32
    %117 = vector.broadcast %cst_45 : f32 to vector<128x128xf32>
    %118 = arith.addf %117, %116 : vector<128x128xf32>
    %119 = math.log %118 : vector<128x128xf32>
    %120 = arith.select %113, %111, %119 : vector<128x128xi1>, vector<128x128xf32>
    %c0_46 = arith.constant 0 : index
    %c0_47 = arith.constant 0 : index
    %121 = vector.load %arg9[%c0_46, %c0_47] : memref<1x128xf32, #tpu.memory_space<vmem>>, vector<1x128xf32>
    %c0_48 = arith.constant 0 : index
    %c0_49 = arith.constant 0 : index
    %122 = vector.load %arg10[%c0_48, %c0_49] : memref<1x128xf32, #tpu.memory_space<vmem>>, vector<1x128xf32>
    %cst_50 = arith.constant dense<0.000000e+00> : vector<128xf32>
    %123 = vector.multi_reduction <add>, %120, %cst_50 [0] : vector<128x128xf32> to vector<128xf32>
    %124 = vector.shape_cast %123 : vector<128xf32> to vector<1x128xf32>
    %cst_51 = arith.constant 1.280000e+02 : f32
    %125 = vector.broadcast %cst_51 : f32 to vector<1x128xf32>
    %126 = arith.divf %124, %125 : vector<1x128xf32>
    %127 = vector.broadcast %126 : vector<1x128xf32> to vector<128x128xf32>
    %128 = arith.subf %120, %127 : vector<128x128xf32>
    %129 = vector.broadcast %126 : vector<1x128xf32> to vector<128x128xf32>
    %130 = arith.subf %120, %129 : vector<128x128xf32>
    %131 = arith.mulf %128, %130 : vector<128x128xf32>
    %cst_52 = arith.constant dense<0.000000e+00> : vector<128xf32>
    %132 = vector.multi_reduction <add>, %131, %cst_52 [0] : vector<128x128xf32> to vector<128xf32>
    %133 = vector.shape_cast %132 : vector<128xf32> to vector<1x128xf32>
    %cst_53 = arith.constant 1.280000e+02 : f32
    %134 = vector.broadcast %cst_53 : f32 to vector<1x128xf32>
    %135 = arith.divf %133, %134 : vector<1x128xf32>
    %136 = vector.broadcast %126 : vector<1x128xf32> to vector<128x128xf32>
    %137 = arith.subf %120, %136 : vector<128x128xf32>
    %cst_54 = arith.constant 9.99999974E-6 : f32
    %138 = vector.broadcast %cst_54 : f32 to vector<1x128xf32>
    %139 = arith.addf %135, %138 : vector<1x128xf32>
    %140 = math.rsqrt %139 : vector<1x128xf32>
    %141 = vector.broadcast %140 : vector<1x128xf32> to vector<128x128xf32>
    %142 = arith.mulf %137, %141 : vector<128x128xf32>
    %143 = vector.broadcast %121 : vector<1x128xf32> to vector<128x128xf32>
    %144 = arith.mulf %142, %143 : vector<128x128xf32>
    %145 = vector.broadcast %122 : vector<1x128xf32> to vector<128x128xf32>
    %146 = arith.addf %144, %145 : vector<128x128xf32>
    %c0_55 = arith.constant 0 : index
    %c0_56 = arith.constant 0 : index
    %147 = vector.load %arg11[%c0_55, %c0_56] : memref<128x128xf32, #tpu.memory_space<vmem>>, vector<128x128xf32>
    tpu.vector_store %arg11[%c0_55, %c0_56], %146 {strides = array<i32>} : memref<128x128xf32, #tpu.memory_space<vmem>>, vector<128x128xf32>,
    return
  }
}

</mosaic_0001>

<llo_original>
// kernel: tpu_custom_call.1
$region0: #{tpu_custom_call.1}
  #allocation0 [shape = 'u32[]', space=smem, size = 0x4, offset = 0x4, fixed_abs, tag = 'smem constant byte address 0x4 - core index']
  #allocation1 [shape = 'u32[144,128]{1,0:T(1,128)}', space=vmem, size = 0x12000, scoped, tag = 'internal scratch']
  %s0 = inlined_call_operand.vmem [shape: f32[128,64], index: 0, kind: input, shape index: {}]
  %s1 = inlined_call_operand.vmem [shape: f32[64,256], index: 1, kind: input, shape index: {}]
  %s2 = inlined_call_operand.vmem [shape: f32[1,256], index: 2, kind: input, shape index: {}]
  %s3 = inlined_call_operand.vmem [shape: f32[1,256], index: 3, kind: input, shape index: {}]
  %s4 = inlined_call_operand.vmem [shape: f32[1,256], index: 4, kind: input, shape index: {}]
  %s5 = inlined_call_operand.hbm [shape: f32[128,128], index: 5, kind: input, shape index: {}]
  %s6 = inlined_call_operand.vmem [shape: f32[1,128], index: 6, kind: input, shape index: {}]
  %s7 = inlined_call_operand.vmem [shape: f32[1,128], index: 7, kind: input, shape index: {}]
  %s8 = inlined_call_operand.vmem [shape: f32[1,128], index: 8, kind: input, shape index: {}]
  %s9 = inlined_call_operand.vmem [shape: f32[1,128], index: 9, kind: input, shape index: {}]
  %s10 = inlined_call_operand.vmem [shape: f32[1,128], index: 10, kind: input, shape index: {}]
  %s11 = inlined_call_operand.hbm [shape: f32[128,128], index: 11, kind: output, shape index: {}]
  %s12 = sld [smem:[#allocation0]]
  $region58: #{tpu_custom_call.1} parent=0
    _
  %s14 = ssub.s32 1, %s12
  %s15 = scalar_select 0, %s14, %s12
  $region1: #{tpu_custom_call.1} parent=0
    #allocation2 [shape = 'u8[65536]{0}', space=vmem, size = 0x10000, scoped, tag = 'input window, operand 5, single buffered']
    #allocation3 [shape = 's32[1]{0}', space=sflag, size = 0x4, scoped, tag = 'scoped memory for tpu_custom_call.1']
    #allocation4 [shape = 's32[1]{0}', space=sflag, size = 0x4, scoped, tag = 'scoped memory for tpu_custom_call.1']
    #allocation5 [shape = 'u8[65536]{0}', space=vmem, size = 0x10000, scoped, tag = 'output window, operand 0, single buffered']
    %16 = vsyncpa [#allocation3], 0
    %17 = vsyncpa [#allocation4], 0
    // Predicated region
    $region2: #{tpu_custom_call.1} parent=1 // pred_check
      _
    $region3: #{tpu_custom_call.1} parent=1 // pred_check_branch
      %19 = sbr.rel (0) target = $region5
    $region4: #{tpu_custom_call.1} parent=1 // pred_region
      _
    $region5: #{tpu_custom_call.1} parent=1 // pred_fallthru
      _
    // Predicated region
    $region6: #{tpu_custom_call.1} parent=1 // pred_check
      _
    $region7: #{tpu_custom_call.1} parent=1 // pred_check_branch
      %21 = sbr.rel (0) target = $region9
    $region8: #{tpu_custom_call.1} parent=1 // pred_region
      _
    $region9: #{tpu_custom_call.1} parent=1 // pred_fallthru
      _
    // Predicated region
    $region10: #{tpu_custom_call.1} parent=1 // pred_check
      _
    $region11: #{tpu_custom_call.1} parent=1 // pred_check_branch
      %23 = sbr.rel (0) target = $region13
    $region12: #{tpu_custom_call.1} parent=1 // pred_region
      _
    $region13: #{tpu_custom_call.1} parent=1 // pred_fallthru
      _
    // Predicated region
    $region14: #{tpu_custom_call.1} parent=1 // pred_check
      _
    $region15: #{tpu_custom_call.1} parent=1 // pred_check_branch
      %25 = sbr.rel (0) target = $region17
    $region16: #{tpu_custom_call.1} parent=1 // pred_region
      _
    $region17: #{tpu_custom_call.1} parent=1 // pred_fallthru
      _
    // Predicated region
    $region18: #{tpu_custom_call.1} parent=1 // pred_check
      _
    $region19: #{tpu_custom_call.1} parent=1 // pred_check_branch
      %27 = sbr.rel (0) target = $region21
    $region20: #{tpu_custom_call.1} parent=1 // pred_region
      _
    $region21: #{tpu_custom_call.1} parent=1 // pred_fallthru
      _
    // Predicated region
    $region22: #{tpu_custom_call.1} parent=1 // pred_check
      _
    $region23: #{tpu_custom_call.1} parent=1 // pred_check_branch
      %29 = sbr.rel (0) target = $region25
    $region24: #{tpu_custom_call.1} parent=1 // pred_region
      %s31 = ssub.s32 2048, 2048
      %32 = vsyncadd [#allocation3], %s31
      %s33 = sshll.u32 [#allocation2], 4
      %s34 = int_to_ptr.vmem [resolvable:$true] %s33
      %39 = dma.hbm_to_vmem [thread:$0]  %s5, 2048, %s34, [#allocation3], 128, 128, 8
    $region25: #{tpu_custom_call.1} parent=1 // pred_fallthru
      _
    // Predicated region
    $region26: #{tpu_custom_call.1} parent=1 // pred_check
      _
    $region27: #{tpu_custom_call.1} parent=1 // pred_check_branch
      %41 = sbr.rel (0) target = $region29
    $region28: #{tpu_custom_call.1} parent=1 // pred_region
      _
    $region29: #{tpu_custom_call.1} parent=1 // pred_fallthru
      _
    // Predicated region
    $region30: #{tpu_custom_call.1} parent=1 // pred_check
      _
    $region31: #{tpu_custom_call.1} parent=1 // pred_check_branch
      %43 = sbr.rel (0) target = $region33
    $region32: #{tpu_custom_call.1} parent=1 // pred_region
      _
    $region33: #{tpu_custom_call.1} parent=1 // pred_fallthru
      _
    // Predicated region
    $region34: #{tpu_custom_call.1} parent=1 // pred_check
      _
    $region35: #{tpu_custom_call.1} parent=1 // pred_check_branch
      %45 = sbr.rel (0) target = $region37
    $region36: #{tpu_custom_call.1} parent=1 // pred_region
      _
    $region37: #{tpu_custom_call.1} parent=1 // pred_fallthru
      _
    // Predicated region
    $region38: #{tpu_custom_call.1} parent=1 // pred_check
      _
    $region39: #{tpu_custom_call.1} parent=1 // pred_check_branch
      %47 = sbr.rel (0) target = $region41
    $region40: #{tpu_custom_call.1} parent=1 // pred_region
      _
    $region41: #{tpu_custom_call.1} parent=1 // pred_fallthru
      _
    // Predicated region
    $region42: #{tpu_custom_call.1} parent=1 // pred_check
      _
    $region43: #{tpu_custom_call.1} parent=1 // pred_check_branch
      %49 = sbr.rel (0) target = $region45
    $region44: #{tpu_custom_call.1} parent=1 // pred_region
      _
    $region45: #{tpu_custom_call.1} parent=1 // pred_fallthru
      _
    // Predicated region
    $region46: #{tpu_custom_call.1} parent=1 // pred_check
      _
    $region47: #{tpu_custom_call.1} parent=1 // pred_check_branch
      %51 = sbr.rel (0) target = $region49
    $region48: #{tpu_custom_call.1} parent=1 // pred_region
      %52 = dma.done [#allocation3], 2048
    $region49: #{tpu_custom_call.1} parent=1 // pred_fallthru
      _
    %v54 = vld [vmem:[%s0] sm:$0xff]
    %v55 = vld [vmem:[%s0 + $0x8] sm:$0xff]
    %v56 = vld [vmem:[%s0 + $0x10] sm:$0xff]
    %v57 = vld [vmem:[%s0 + $0x18] sm:$0xff]
    %v58 = vld [vmem:[%s0 + $0x20] sm:$0xff]
    %v59 = vld [vmem:[%s0 + $0x28] sm:$0xff]
    %v60 = vld [vmem:[%s0 + $0x30] sm:$0xff]
    %v61 = vld [vmem:[%s0 + $0x38] sm:$0xff]
    %v62 = vld [vmem:[%s0 + $0x40] sm:$0xff]
    %v63 = vld [vmem:[%s0 + $0x48] sm:$0xff]
    %v64 = vld [vmem:[%s0 + $0x50] sm:$0xff]
    %v65 = vld [vmem:[%s0 + $0x58] sm:$0xff]
    %v66 = vld [vmem:[%s0 + $0x60] sm:$0xff]
    %v67 = vld [vmem:[%s0 + $0x68] sm:$0xff]
    %v68 = vld [vmem:[%s0 + $0x70] sm:$0xff]
    %v69 = vld [vmem:[%s0 + $0x78] sm:$0xff]
    %v70 = vld [vmem:[%s1] sm:$0xff]
    %v71 = vld [vmem:[%s1 + $0x8] sm:$0xff]
    %v72 = vld [vmem:[%s1 + $0x10] sm:$0xff]
    %v73 = vld [vmem:[%s1 + $0x18] sm:$0xff]
    %v74 = vld [vmem:[%s1 + $0x20] sm:$0xff]
    %v75 = vld [vmem:[%s1 + $0x28] sm:$0xff]
    %v76 = vld [vmem:[%s1 + $0x30] sm:$0xff]
    %v77 = vld [vmem:[%s1 + $0x38] sm:$0xff]
    %v78 = vld [vmem:[%s1 + $0x40] sm:$0xff]
    %v79 = vld [vmem:[%s1 + $0x48] sm:$0xff]
    %v80 = vld [vmem:[%s1 + $0x50] sm:$0xff]
    %v81 = vld [vmem:[%s1 + $0x58] sm:$0xff]
    %v82 = vld [vmem:[%s1 + $0x60] sm:$0xff]
    %v83 = vld [vmem:[%s1 + $0x68] sm:$0xff]
    %v84 = vld [vmem:[%s1 + $0x70] sm:$0xff]
    %v85 = vld [vmem:[%s1 + $0x78] sm:$0xff]
    %v86 = vpack.c.bf16 %v55, %v54
    %v87 = vpack.c.bf16 %v57, %v56
    %v88 = vpack.c.bf16 %v59, %v58
    %v89 = vpack.c.bf16 %v61, %v60
    %v90 = vpack.c.bf16 %v63, %v62
    %v91 = vpack.c.bf16 %v65, %v64
    %v92 = vpack.c.bf16 %v67, %v66
    %v93 = vpack.c.bf16 %v69, %v68
    %v94 = vpack.c.bf16 %v72, %v70
    %v95 = vpack.c.bf16 %v73, %v71
    %v96 = vpack.c.bf16 %v76, %v74
    %v97 = vpack.c.bf16 %v77, %v75
    %v98 = vpack.c.bf16 %v80, %v78
    %v99 = vpack.c.bf16 %v81, %v79
    %v100 = vpack.c.bf16 %v84, %v82
    %v101 = vpack.c.bf16 %v85, %v83
    %v102 = vld [vmem:[%s2] sm:$0x3]
    %v104 = vlaneseq
    %v105 = vshrl.u32 %v104, 7
    %v106 = vsub.s32 0, %v105
    %v107 = vrot.slane %v102, %v106
    %v108 = vlaneseq
    %v109 = vshrl.u32 %v108, 7
    %v110 = vsub.s32 1, %v109
    %v111 = vrot.slane %v102, %v110
    %vm114 = vcmask 523264
    %v116 = vsel %vm114, %v86, 0
    %v119 = vsel %vm114, %v87, 0
    %v122 = vsel %vm114, %v88, 0
    %v125 = vsel %vm114, %v89, 0
    %v128 = vsel %vm114, %v90, 0
    %v131 = vsel %vm114, %v91, 0
    %v134 = vsel %vm114, %v92, 0
    %v137 = vsel %vm114, %v93, 0
    %139 = vmatprep.subr.bf16.mxu0 0
    %140 = vmatpush1.bf16.msra.mxu0 0
    %141 = vmatprep.subr.bf16.mxu0 0
    %142 = vmatpush1.bf16.msra.mxu0 0
    %143 = vmatprep.subr.bf16.mxu0 0
    %144 = vmatpush1.bf16.msra.mxu0 0
    %145 = vmatprep.subr.bf16.mxu0 0
    %146 = vmatpush1.bf16.msra.mxu0 0
    %147 = vmatprep.subr.bf16.mxu0 %v101
    %148 = vmatpush1.bf16.msra.mxu0 %v100
    %149 = vmatprep.subr.bf16.mxu0 %v99
    %150 = vmatpush1.bf16.msra.mxu0 %v98
    %151 = vmatprep.subr.bf16.mxu0 %v97
    %152 = vmatpush1.bf16.msra.mxu0 %v96
    %153 = vmatprep.subr.bf16.mxu0 %v95
    %154 = vmatpush1.bf16.msra.mxu0 %v94
    %155 = vmatprep.subr.bf16.mxu0 0
    %156 = vmatpush2.bf16.msra.mxu0 0
    %157 = vmatprep.subr.bf16.mxu0 0
    %158 = vmatpush2.bf16.msra.mxu0 0
    %159 = vmatprep.subr.bf16.mxu0 0
    %160 = vmatpush2.bf16.msra.mxu0 0
    %161 = vmatprep.subr.bf16.mxu0 0
    %162 = vmatpush2.bf16.msra.mxu0 0
    %163 = vmatprep.subr.bf16.mxu0 0
    %164 = vmatpush2.bf16.msra.mxu0 0
    %165 = vmatprep.subr.bf16.mxu0 0
    %166 = vmatpush2.bf16.msra.mxu0 0
    %167 = vmatprep.subr.bf16.mxu0 0
    %168 = vmatpush2.bf16.msra.mxu0 0
    %169 = vmatprep.subr.bf16.mxu0 0
    %170 = vmatpush2.bf16.msra.mxu0 0
    %171 = vmatprep.mubr.bf16.mxu0 0
    %172 = vmatmul.mubr.bf16.gmra.mxu0 %v116
    %v173 = vpop.f32.mrf.mxu0
    %v174 = vadd.f32 %v107, %v173
    %v175 = vpop.f32.mrf.mxu0
    %v176 = vadd.f32 %v111, %v175
    %v177 = vpop.f32.mrf.mxu0
    %v178 = vadd.f32 %v107, %v177
    %v179 = vpop.f32.mrf.mxu0
    %v180 = vadd.f32 %v111, %v179
    %181 = vmatprep.mubr.bf16.mxu0 0
    %182 = vmatmul.mubr.bf16.gmra.mxu0 %v119
    %v183 = vpop.f32.mrf.mxu0
    %v184 = vadd.f32 %v107, %v183
    %v185 = vpop.f32.mrf.mxu0
    %v186 = vadd.f32 %v111, %v185
    %v187 = vpop.f32.mrf.mxu0
    %v188 = vadd.f32 %v107, %v187
    %v189 = vpop.f32.mrf.mxu0
    %v190 = vadd.f32 %v111, %v189
    %191 = vmatprep.mubr.bf16.mxu0 0
    %192 = vmatmul.mubr.bf16.gmra.mxu0 %v122
    %v193 = vpop.f32.mrf.mxu0
    %v194 = vadd.f32 %v107, %v193
    %v195 = vpop.f32.mrf.mxu0
    %v196 = vadd.f32 %v111, %v195
    %v197 = vpop.f32.mrf.mxu0
    %v198 = vadd.f32 %v107, %v197
    %v199 = vpop.f32.mrf.mxu0
    %v200 = vadd.f32 %v111, %v199
    %201 = vmatprep.mubr.bf16.mxu0 0
    %202 = vmatmul.mubr.bf16.gmra.mxu0 %v125
    %v203 = vpop.f32.mrf.mxu0
    %v204 = vadd.f32 %v107, %v203
    %v205 = vpop.f32.mrf.mxu0
    %v206 = vadd.f32 %v111, %v205
    %v207 = vpop.f32.mrf.mxu0
    %v208 = vadd.f32 %v107, %v207
    %v209 = vpop.f32.mrf.mxu0
    %v210 = vadd.f32 %v111, %v209
    %211 = vmatprep.mubr.bf16.mxu0 0
    %212 = vmatmul.mubr.bf16.gmra.mxu0 %v128
    %v213 = vpop.f32.mrf.mxu0
    %v214 = vadd.f32 %v107, %v213
    %v215 = vpop.f32.mrf.mxu0
    %v216 = vadd.f32 %v111, %v215
    %v217 = vpop.f32.mrf.mxu0
    %v218 = vadd.f32 %v107, %v217
    %v219 = vpop.f32.mrf.mxu0
    %v220 = vadd.f32 %v111, %v219
    %221 = vmatprep.mubr.bf16.mxu0 0
    %222 = vmatmul.mubr.bf16.gmra.mxu0 %v131
    %v223 = vpop.f32.mrf.mxu0
    %v224 = vadd.f32 %v107, %v223
    %v225 = vpop.f32.mrf.mxu0
    %v226 = vadd.f32 %v111, %v225
    %v227 = vpop.f32.mrf.mxu0
    %v228 = vadd.f32 %v107, %v227
    %v229 = vpop.f32.mrf.mxu0
    %v230 = vadd.f32 %v111, %v229
    %231 = vmatprep.mubr.bf16.mxu0 0
    %232 = vmatmul.mubr.bf16.gmra.mxu0 %v134
    %v233 = vpop.f32.mrf.mxu0
    %v234 = vadd.f32 %v107, %v233
    %v235 = vpop.f32.mrf.mxu0
    %v236 = vadd.f32 %v111, %v235
    %v237 = vpop.f32.mrf.mxu0
    %v238 = vadd.f32 %v107, %v237
    %v239 = vpop.f32.mrf.mxu0
    %v240 = vadd.f32 %v111, %v239
    %241 = vmatprep.mubr.bf16.mxu0 0
    %242 = vmatmul.mubr.bf16.gmra.mxu0 %v137
    %v243 = vpop.f32.mrf.mxu0
    %v244 = vadd.f32 %v107, %v243
    %v245 = vpop.f32.mrf.mxu0
    %v246 = vadd.f32 %v111, %v245
    %v247 = vpop.f32.mrf.mxu0
    %v248 = vadd.f32 %v107, %v247
    %v249 = vpop.f32.mrf.mxu0
    %v250 = vadd.f32 %v111, %v249
    %251 = vdwg.mxu0
    %v252 = vld [vmem:[%s3] sm:$0x3]
    %v253 = vld [vmem:[%s4] sm:$0x3]
    %v254 = vadd.f32 %v174, %v178
    %v255 = vadd.f32 %v254, %v184
    %v256 = vadd.f32 %v255, %v188
    %v257 = vadd.f32 %v256, %v194
    %v258 = vadd.f32 %v257, %v198
    %v259 = vadd.f32 %v258, %v204
    %v260 = vadd.f32 %v259, %v208
    %v261 = vadd.f32 %v260, %v214
    %v262 = vadd.f32 %v261, %v218
    %v263 = vadd.f32 %v262, %v224
    %v264 = vadd.f32 %v263, %v228
    %v265 = vadd.f32 %v264, %v234
    %v266 = vadd.f32 %v265, %v238
    %v267 = vadd.f32 %v266, %v244
    %v268 = vadd.f32 %v267, %v248
    %v269 = vrot.slane %v268, 4
    %v270 = vadd.f32 %v268, %v269
    %v271 = vrot.slane %v270, 2
    %v272 = vadd.f32 %v270, %v271
    %v273 = vrot.slane %v272, 1
    %v274 = vadd.f32 %v272, %v273
    %v275 = vadd.f32 %v176, %v180
    %v276 = vadd.f32 %v275, %v186
    %v277 = vadd.f32 %v276, %v190
    %v278 = vadd.f32 %v277, %v196
    %v279 = vadd.f32 %v278, %v200
    %v280 = vadd.f32 %v279, %v206
    %v281 = vadd.f32 %v280, %v210
    %v282 = vadd.f32 %v281, %v216
    %v283 = vadd.f32 %v282, %v220
    %v284 = vadd.f32 %v283, %v226
    %v285 = vadd.f32 %v284, %v230
    %v286 = vadd.f32 %v285, %v236
    %v287 = vadd.f32 %v286, %v240
    %v288 = vadd.f32 %v287, %v246
    %v289 = vadd.f32 %v288, %v250
    %v290 = vrot.slane %v289, 4
    %v291 = vadd.f32 %v289, %v290
    %v292 = vrot.slane %v291, 2
    %v293 = vadd.f32 %v291, %v292
    %v294 = vrot.slane %v293, 1
    %v295 = vadd.f32 %v293, %v294
    %v296 = vrcp.pop 128.0
    %v297 = vmul.f32 %v274, %v296
    %v298 = vmul.f32 %v295, %v296
    %v299 = vsub.f32 %v174, %v297
    %v300 = vsub.f32 %v176, %v298
    %v301 = vsub.f32 %v178, %v297
    %v302 = vsub.f32 %v180, %v298
    %v303 = vsub.f32 %v184, %v297
    %v304 = vsub.f32 %v186, %v298
    %v305 = vsub.f32 %v188, %v297
    %v306 = vsub.f32 %v190, %v298
    %v307 = vsub.f32 %v194, %v297
    %v308 = vsub.f32 %v196, %v298
    %v309 = vsub.f32 %v198, %v297
    %v310 = vsub.f32 %v200, %v298
    %v311 = vsub.f32 %v204, %v297
    %v312 = vsub.f32 %v206, %v298
    %v313 = vsub.f32 %v208, %v297
    %v314 = vsub.f32 %v210, %v298
    %v315 = vsub.f32 %v214, %v297
    %v316 = vsub.f32 %v216, %v298
    %v317 = vsub.f32 %v218, %v297
    %v318 = vsub.f32 %v220, %v298
    %v319 = vsub.f32 %v224, %v297
    %v320 = vsub.f32 %v226, %v298
    %v321 = vsub.f32 %v228, %v297
    %v322 = vsub.f32 %v230, %v298
    %v323 = vsub.f32 %v234, %v297
    %v324 = vsub.f32 %v236, %v298
    %v325 = vsub.f32 %v238, %v297
    %v326 = vsub.f32 %v240, %v298
    %v327 = vsub.f32 %v244, %v297
    %v328 = vsub.f32 %v246, %v298
    %v329 = vsub.f32 %v248, %v297
    %v330 = vsub.f32 %v250, %v298
    %v331 = vmul.f32 %v299, %v299
    %v332 = vmul.f32 %v300, %v300
    %v333 = vmul.f32 %v301, %v301
    %v334 = vmul.f32 %v302, %v302
    %v335 = vmul.f32 %v303, %v303
    %v336 = vmul.f32 %v304, %v304
    %v337 = vmul.f32 %v305, %v305
    %v338 = vmul.f32 %v306, %v306
    %v339 = vmul.f32 %v307, %v307
    %v340 = vmul.f32 %v308, %v308
    %v341 = vmul.f32 %v309, %v309
    %v342 = vmul.f32 %v310, %v310
    %v343 = vmul.f32 %v311, %v311
    %v344 = vmul.f32 %v312, %v312
    %v345 = vmul.f32 %v313, %v313
    %v346 = vmul.f32 %v314, %v314
    %v347 = vmul.f32 %v315, %v315
    %v348 = vmul.f32 %v316, %v316
    %v349 = vmul.f32 %v317, %v317
    %v350 = vmul.f32 %v318, %v318
    %v351 = vmul.f32 %v319, %v319
    %v352 = vmul.f32 %v320, %v320
    %v353 = vmul.f32 %v321, %v321
    %v354 = vmul.f32 %v322, %v322
    %v355 = vmul.f32 %v323, %v323
    %v356 = vmul.f32 %v324, %v324
    %v357 = vmul.f32 %v325, %v325
    %v358 = vmul.f32 %v326, %v326
    %v359 = vmul.f32 %v327, %v327
    %v360 = vmul.f32 %v328, %v328
    %v361 = vmul.f32 %v329, %v329
    %v362 = vmul.f32 %v330, %v330
    %v363 = vadd.f32 %v331, %v333
    %v364 = vadd.f32 %v363, %v335
    %v365 = vadd.f32 %v364, %v337
    %v366 = vadd.f32 %v365, %v339
    %v367 = vadd.f32 %v366, %v341
    %v368 = vadd.f32 %v367, %v343
    %v369 = vadd.f32 %v368, %v345
    %v370 = vadd.f32 %v369, %v347
    %v371 = vadd.f32 %v370, %v349
    %v372 = vadd.f32 %v371, %v351
    %v373 = vadd.f32 %v372, %v353
    %v374 = vadd.f32 %v373, %v355
    %v375 = vadd.f32 %v374, %v357
    %v376 = vadd.f32 %v375, %v359
    %v377 = vadd.f32 %v376, %v361
    %v378 = vrot.slane %v377, 4
    %v379 = vadd.f32 %v377, %v378
    %v380 = vrot.slane %v379, 2
    %v381 = vadd.f32 %v379, %v380
    %v382 = vrot.slane %v381, 1
    %v383 = vadd.f32 %v381, %v382
    %v384 = vadd.f32 %v332, %v334
    %v385 = vadd.f32 %v384, %v336
    %v386 = vadd.f32 %v385, %v338
    %v387 = vadd.f32 %v386, %v340
    %v388 = vadd.f32 %v387, %v342
    %v389 = vadd.f32 %v388, %v344
    %v390 = vadd.f32 %v389, %v346
    %v391 = vadd.f32 %v390, %v348
    %v392 = vadd.f32 %v391, %v350
    %v393 = vadd.f32 %v392, %v352
    %v394 = vadd.f32 %v393, %v354
    %v395 = vadd.f32 %v394, %v356
    %v396 = vadd.f32 %v395, %v358
    %v397 = vadd.f32 %v396, %v360
    %v398 = vadd.f32 %v397, %v362
    %v399 = vrot.slane %v398, 4
    %v400 = vadd.f32 %v398, %v399
    %v401 = vrot.slane %v400, 2
    %v402 = vadd.f32 %v400, %v401
    %v403 = vrot.slane %v402, 1
    %v404 = vadd.f32 %v402, %v403
    %v405 = vmul.f32 %v383, %v296
    %v406 = vmul.f32 %v404, %v296
    %v407 = vadd.f32 %v405, 1e-05
    %v408 = vadd.f32 %v406, 1e-05
    %v409 = vrsqrt.pop %v407
    %v410 = vrsqrt.pop %v408
    %v411 = vmul.f32 %v299, %v409
    %v412 = vmul.f32 %v300, %v410
    %v413 = vmul.f32 %v301, %v409
    %v414 = vmul.f32 %v302, %v410
    %v415 = vmul.f32 %v303, %v409
    %v416 = vmul.f32 %v304, %v410
    %v417 = vmul.f32 %v305, %v409
    %v418 = vmul.f32 %v306, %v410
    %v419 = vmul.f32 %v307, %v409
    %v420 = vmul.f32 %v308, %v410
    %v421 = vmul.f32 %v309, %v409
    %v422 = vmul.f32 %v310, %v410
    %v423 = vmul.f32 %v311, %v409
    %v424 = vmul.f32 %v312, %v410
    %v425 = vmul.f32 %v313, %v409
    %v426 = vmul.f32 %v314, %v410
    %v427 = vmul.f32 %v315, %v409
    %v428 = vmul.f32 %v316, %v410
    %v429 = vmul.f32 %v317, %v409
    %v430 = vmul.f32 %v318, %v410
    %v431 = vmul.f32 %v319, %v409
    %v432 = vmul.f32 %v320, %v410
    %v433 = vmul.f32 %v321, %v409
    %v434 = vmul.f32 %v322, %v410
    %v435 = vmul.f32 %v323, %v409
    %v436 = vmul.f32 %v324, %v410
    %v437 = vmul.f32 %v325, %v409
    %v438 = vmul.f32 %v326, %v410
    %v439 = vmul.f32 %v327, %v409
    %v440 = vmul.f32 %v328, %v410
    %v441 = vmul.f32 %v329, %v409
    %v442 = vmul.f32 %v330, %v410
    %v444 = vlaneseq
    %v445 = vshrl.u32 %v444, 7
    %v446 = vsub.s32 0, %v445
    %v447 = vrot.slane %v252, %v446
    %v448 = vlaneseq
    %v449 = vshrl.u32 %v448, 7
    %v450 = vsub.s32 1, %v449
    %v451 = vrot.slane %v252, %v450
    %v454 = vmul.f32 %v411, %v447
    %v455 = vmul.f32 %v412, %v451
    %v456 = vmul.f32 %v413, %v447
    %v457 = vmul.f32 %v414, %v451
    %v458 = vmul.f32 %v415, %v447
    %v459 = vmul.f32 %v416, %v451
    %v460 = vmul.f32 %v417, %v447
    %v461 = vmul.f32 %v418, %v451
    %v462 = vmul.f32 %v419, %v447
    %v463 = vmul.f32 %v420, %v451
    %v464 = vmul.f32 %v421, %v447
    %v465 = vmul.f32 %v422, %v451
    %v466 = vmul.f32 %v423, %v447
    %v467 = vmul.f32 %v424, %v451
    %v468 = vmul.f32 %v425, %v447
    %v469 = vmul.f32 %v426, %v451
    %v470 = vmul.f32 %v427, %v447
    %v471 = vmul.f32 %v428, %v451
    %v472 = vmul.f32 %v429, %v447
    %v473 = vmul.f32 %v430, %v451
    %v474 = vmul.f32 %v431, %v447
    %v475 = vmul.f32 %v432, %v451
    %v476 = vmul.f32 %v433, %v447
    %v477 = vmul.f32 %v434, %v451
    %v478 = vmul.f32 %v435, %v447
    %v479 = vmul.f32 %v436, %v451
    %v480 = vmul.f32 %v437, %v447
    %v481 = vmul.f32 %v438, %v451
    %v482 = vmul.f32 %v439, %v447
    %v483 = vmul.f32 %v440, %v451
    %v484 = vmul.f32 %v441, %v447
    %v485 = vmul.f32 %v442, %v451
    %v487 = vlaneseq
    %v488 = vshrl.u32 %v487, 7
    %v489 = vsub.s32 0, %v488
    %v490 = vrot.slane %v253, %v489
    %v491 = vlaneseq
    %v492 = vshrl.u32 %v491, 7
    %v493 = vsub.s32 1, %v492
    %v494 = vrot.slane %v253, %v493
    %v497 = vadd.f32 %v454, %v490
    %v498 = vadd.f32 %v455, %v494
    %v499 = vadd.f32 %v456, %v490
    %v500 = vadd.f32 %v457, %v494
    %v501 = vadd.f32 %v458, %v490
    %v502 = vadd.f32 %v459, %v494
    %v503 = vadd.f32 %v460, %v490
    %v504 = vadd.f32 %v461, %v494
    %v505 = vadd.f32 %v462, %v490
    %v506 = vadd.f32 %v463, %v494
    %v507 = vadd.f32 %v464, %v490
    %v508 = vadd.f32 %v465, %v494
    %v509 = vadd.f32 %v466, %v490
    %v510 = vadd.f32 %v467, %v494
    %v511 = vadd.f32 %v468, %v490
    %v512 = vadd.f32 %v469, %v494
    %v513 = vadd.f32 %v470, %v490
    %v514 = vadd.f32 %v471, %v494
    %v515 = vadd.f32 %v472, %v490
    %v516 = vadd.f32 %v473, %v494
    %v517 = vadd.f32 %v474, %v490
    %v518 = vadd.f32 %v475, %v494
    %v519 = vadd.f32 %v476, %v490
    %v520 = vadd.f32 %v477, %v494
    %v521 = vadd.f32 %v478, %v490
    %v522 = vadd.f32 %v479, %v494
    %v523 = vadd.f32 %v480, %v490
    %v524 = vadd.f32 %v481, %v494
    %v525 = vadd.f32 %v482, %v490
    %v526 = vadd.f32 %v483, %v494
    %v527 = vadd.f32 %v484, %v490
    %v528 = vadd.f32 %v485, %v494
    %v529 = vsub.f32 0.0, %v497
    %v530 = vsub.f32 0.0, %v499
    %v531 = vsub.f32 0.0, %v501
    %v532 = vsub.f32 0.0, %v503
    %v533 = vsub.f32 0.0, %v505
    %v534 = vsub.f32 0.0, %v507
    %v535 = vsub.f32 0.0, %v509
    %v536 = vsub.f32 0.0, %v511
    %v537 = vsub.f32 0.0, %v513
    %v538 = vsub.f32 0.0, %v515
    %v539 = vsub.f32 0.0, %v517
    %v540 = vsub.f32 0.0, %v519
    %v541 = vsub.f32 0.0, %v521
    %v542 = vsub.f32 0.0, %v523
    %v543 = vsub.f32 0.0, %v525
    %v544 = vsub.f32 0.0, %v527
    %v545 = vmul.f32 %v529, 1.442695
    %v546 = vpow.pop %v545
    %v547 = vmul.f32 %v530, 1.442695
    %v548 = vpow.pop %v547
    %v549 = vmul.f32 %v531, 1.442695
    %v550 = vpow.pop %v549
    %v551 = vmul.f32 %v532, 1.442695
    %v552 = vpow.pop %v551
    %v553 = vmul.f32 %v533, 1.442695
    %v554 = vpow.pop %v553
    %v555 = vmul.f32 %v534, 1.442695
    %v556 = vpow.pop %v555
    %v557 = vmul.f32 %v535, 1.442695
    %v558 = vpow.pop %v557
    %v559 = vmul.f32 %v536, 1.442695
    %v560 = vpow.pop %v559
    %v561 = vmul.f32 %v537, 1.442695
    %v562 = vpow.pop %v561
    %v563 = vmul.f32 %v538, 1.442695
    %v564 = vpow.pop %v563
    %v565 = vmul.f32 %v539, 1.442695
    %v566 = vpow.pop %v565
    %v567 = vmul.f32 %v540, 1.442695
    %v568 = vpow.pop %v567
    %v569 = vmul.f32 %v541, 1.442695
    %v570 = vpow.pop %v569
    %v571 = vmul.f32 %v542, 1.442695
    %v572 = vpow.pop %v571
    %v573 = vmul.f32 %v543, 1.442695
    %v574 = vpow.pop %v573
    %v575 = vmul.f32 %v544, 1.442695
    %v576 = vpow.pop %v575
    %v577 = vadd.f32 %v546, 1.0
    %v578 = vadd.f32 %v548, 1.0
    %v579 = vadd.f32 %v550, 1.0
    %v580 = vadd.f32 %v552, 1.0
    %v581 = vadd.f32 %v554, 1.0
    %v582 = vadd.f32 %v556, 1.0
    %v583 = vadd.f32 %v558, 1.0
    %v584 = vadd.f32 %v560, 1.0
    %v585 = vadd.f32 %v562, 1.0
    %v586 = vadd.f32 %v564, 1.0
    %v587 = vadd.f32 %v566, 1.0
    %v588 = vadd.f32 %v568, 1.0
    %v589 = vadd.f32 %v570, 1.0
    %v590 = vadd.f32 %v572, 1.0
    %v591 = vadd.f32 %v574, 1.0
    %v592 = vadd.f32 %v576, 1.0
    %v593 = vrcp.pop %v577
    %v594 = vmul.f32 1.0, %v593
    %v595 = vrcp.pop %v578
    %v596 = vmul.f32 1.0, %v595
    %v597 = vrcp.pop %v579
    %v598 = vmul.f32 1.0, %v597
    %v599 = vrcp.pop %v580
    %v600 = vmul.f32 1.0, %v599
    %v601 = vrcp.pop %v581
    %v602 = vmul.f32 1.0, %v601
    %v603 = vrcp.pop %v582
    %v604 = vmul.f32 1.0, %v603
    %v605 = vrcp.pop %v583
    %v606 = vmul.f32 1.0, %v605
    %v607 = vrcp.pop %v584
    %v608 = vmul.f32 1.0, %v607
    %v609 = vrcp.pop %v585
    %v610 = vmul.f32 1.0, %v609
    %v611 = vrcp.pop %v586
    %v612 = vmul.f32 1.0, %v611
    %v613 = vrcp.pop %v587
    %v614 = vmul.f32 1.0, %v613
    %v615 = vrcp.pop %v588
    %v616 = vmul.f32 1.0, %v615
    %v617 = vrcp.pop %v589
    %v618 = vmul.f32 1.0, %v617
    %v619 = vrcp.pop %v590
    %v620 = vmul.f32 1.0, %v619
    %v621 = vrcp.pop %v591
    %v622 = vmul.f32 1.0, %v621
    %v623 = vrcp.pop %v592
    %v624 = vmul.f32 1.0, %v623
    %vm625 = vcmp.gt.f32.partialorder %v498, 20.0
    %vm626 = vcmp.gt.f32.partialorder %v500, 20.0
    %vm627 = vcmp.gt.f32.partialorder %v502, 20.0
    %vm628 = vcmp.gt.f32.partialorder %v504, 20.0
    %vm629 = vcmp.gt.f32.partialorder %v506, 20.0
    %vm630 = vcmp.gt.f32.partialorder %v508, 20.0
    %vm631 = vcmp.gt.f32.partialorder %v510, 20.0
    %vm632 = vcmp.gt.f32.partialorder %v512, 20.0
    %vm633 = vcmp.gt.f32.partialorder %v514, 20.0
    %vm634 = vcmp.gt.f32.partialorder %v516, 20.0
    %vm635 = vcmp.gt.f32.partialorder %v518, 20.0
    %vm636 = vcmp.gt.f32.partialorder %v520, 20.0
    %vm637 = vcmp.gt.f32.partialorder %v522, 20.0
    %vm638 = vcmp.gt.f32.partialorder %v524, 20.0
    %vm639 = vcmp.gt.f32.partialorder %v526, 20.0
    %vm640 = vcmp.gt.f32.partialorder %v528, 20.0
    %v641 = vmin.f32 %v498, 20.0
    %v642 = vmin.f32 %v500, 20.0
    %v643 = vmin.f32 %v502, 20.0
    %v644 = vmin.f32 %v504, 20.0
    %v645 = vmin.f32 %v506, 20.0
    %v646 = vmin.f32 %v508, 20.0
    %v647 = vmin.f32 %v510, 20.0
    %v648 = vmin.f32 %v512, 20.0
    %v649 = vmin.f32 %v514, 20.0
    %v650 = vmin.f32 %v516, 20.0
    %v651 = vmin.f32 %v518, 20.0
    %v652 = vmin.f32 %v520, 20.0
    %v653 = vmin.f32 %v522, 20.0
    %v654 = vmin.f32 %v524, 20.0
    %v655 = vmin.f32 %v526, 20.0
    %v656 = vmin.f32 %v528, 20.0
    %v657 = vmul.f32 %v641, 1.442695
    %v658 = vpow.pop %v657
    %v659 = vmul.f32 %v642, 1.442695
    %v660 = vpow.pop %v659
    %v661 = vmul.f32 %v643, 1.442695
    %v662 = vpow.pop %v661
    %v663 = vmul.f32 %v644, 1.442695
    %v664 = vpow.pop %v663
    %v665 = vmul.f32 %v645, 1.442695
    %v666 = vpow.pop %v665
    %v667 = vmul.f32 %v646, 1.442695
    %v668 = vpow.pop %v667
    %v669 = vmul.f32 %v647, 1.442695
    %v670 = vpow.pop %v669
    %v671 = vmul.f32 %v648, 1.442695
    %v672 = vpow.pop %v671
    %v673 = vmul.f32 %v649, 1.442695
    %v674 = vpow.pop %v673
    %v675 = vmul.f32 %v650, 1.442695
    %v676 = vpow.pop %v675
    %v677 = vmul.f32 %v651, 1.442695
    %v678 = vpow.pop %v677
    %v679 = vmul.f32 %v652, 1.442695
    %v680 = vpow.pop %v679
    %v681 = vmul.f32 %v653, 1.442695
    %v682 = vpow.pop %v681
    %v683 = vmul.f32 %v654, 1.442695
    %v684 = vpow.pop %v683
    %v685 = vmul.f32 %v655, 1.442695
    %v686 = vpow.pop %v685
    %v687 = vmul.f32 %v656, 1.442695
    %v688 = vpow.pop %v687
    %v689 = vadd.f32 %v658, 1.0
    %v690 = vadd.f32 %v660, 1.0
    %v691 = vadd.f32 %v662, 1.0
    %v692 = vadd.f32 %v664, 1.0
    %v693 = vadd.f32 %v666, 1.0
    %v694 = vadd.f32 %v668, 1.0
    %v695 = vadd.f32 %v670, 1.0
    %v696 = vadd.f32 %v672, 1.0
    %v697 = vadd.f32 %v674, 1.0
    %v698 = vadd.f32 %v676, 1.0
    %v699 = vadd.f32 %v678, 1.0
    %v700 = vadd.f32 %v680, 1.0
    %v701 = vadd.f32 %v682, 1.0
    %v702 = vadd.f32 %v684, 1.0
    %v703 = vadd.f32 %v686, 1.0
    %v704 = vadd.f32 %v688, 1.0
    %v705 = vlog2.pop %v689
    %v706 = vmul.f32 %v705, 0.6931472
    %v707 = vlog2.pop %v690
    %v708 = vmul.f32 %v707, 0.6931472
    %v709 = vlog2.pop %v691
    %v710 = vmul.f32 %v709, 0.6931472
    %v711 = vlog2.pop %v692
    %v712 = vmul.f32 %v711, 0.6931472
    %v713 = vlog2.pop %v693
    %v714 = vmul.f32 %v713, 0.6931472
    %v715 = vlog2.pop %v694
    %v716 = vmul.f32 %v715, 0.6931472
    %v717 = vlog2.pop %v695
    %v718 = vmul.f32 %v717, 0.6931472
    %v719 = vlog2.pop %v696
    %v720 = vmul.f32 %v719, 0.6931472
    %v721 = vlog2.pop %v697
    %v722 = vmul.f32 %v721, 0.6931472
    %v723 = vlog2.pop %v698
    %v724 = vmul.f32 %v723, 0.6931472
    %v725 = vlog2.pop %v699
    %v726 = vmul.f32 %v725, 0.6931472
    %v727 = vlog2.pop %v700
    %v728 = vmul.f32 %v727, 0.6931472
    %v729 = vlog2.pop %v701
    %v730 = vmul.f32 %v729, 0.6931472
    %v731 = vlog2.pop %v702
    %v732 = vmul.f32 %v731, 0.6931472
    %v733 = vlog2.pop %v703
    %v734 = vmul.f32 %v733, 0.6931472
    %v735 = vlog2.pop %v704
    %v736 = vmul.f32 %v735, 0.6931472
    %v737 = vsel %vm625, %v498, %v706
    %v738 = vsel %vm626, %v500, %v708
    %v739 = vsel %vm627, %v502, %v710
    %v740 = vsel %vm628, %v504, %v712
    %v741 = vsel %vm629, %v506, %v714
    %v742 = vsel %vm630, %v508, %v716
    %v743 = vsel %vm631, %v510, %v718
    %v744 = vsel %vm632, %v512, %v720
    %v745 = vsel %vm633, %v514, %v722
    %v746 = vsel %vm634, %v516, %v724
    %v747 = vsel %vm635, %v518, %v726
    %v748 = vsel %vm636, %v520, %v728
    %v749 = vsel %vm637, %v522, %v730
    %v750 = vsel %vm638, %v524, %v732
    %v751 = vsel %vm639, %v526, %v734
    %v752 = vsel %vm640, %v528, %v736
    %v753 = vmul.f32 %v594, %v737
    %v754 = vmul.f32 %v596, %v738
    %v755 = vmul.f32 %v598, %v739
    %v756 = vmul.f32 %v600, %v740
    %v757 = vmul.f32 %v602, %v741
    %v758 = vmul.f32 %v604, %v742
    %v759 = vmul.f32 %v606, %v743
    %v760 = vmul.f32 %v608, %v744
    %v761 = vmul.f32 %v610, %v745
    %v762 = vmul.f32 %v612, %v746
    %v763 = vmul.f32 %v614, %v747
    %v764 = vmul.f32 %v616, %v748
    %v765 = vmul.f32 %v618, %v749
    %v766 = vmul.f32 %v620, %v750
    %v767 = vmul.f32 %v622, %v751
    %v768 = vmul.f32 %v624, %v752
    %v769 = vld [vmem:[%s7] sm:$0x1]
    %v770 = vld [vmem:[%s8] sm:$0x1]
    %v771 = vadd.f32 %v753, %v754
    %v772 = vadd.f32 %v771, %v755
    %v773 = vadd.f32 %v772, %v756
    %v774 = vadd.f32 %v773, %v757
    %v775 = vadd.f32 %v774, %v758
    %v776 = vadd.f32 %v775, %v759
    %v777 = vadd.f32 %v776, %v760
    %v778 = vadd.f32 %v777, %v761
    %v779 = vadd.f32 %v778, %v762
    %v780 = vadd.f32 %v779, %v763
    %v781 = vadd.f32 %v780, %v764
    %v782 = vadd.f32 %v781, %v765
    %v783 = vadd.f32 %v782, %v766
    %v784 = vadd.f32 %v783, %v767
    %v785 = vadd.f32 %v784, %v768
    %v786 = vrot.slane %v785, 4
    %v787 = vadd.f32 %v785, %v786
    %v788 = vrot.slane %v787, 2
    %v789 = vadd.f32 %v787, %v788
    %v790 = vrot.slane %v789, 1
    %v791 = vadd.f32 %v789, %v790
    %v792 = vmul.f32 %v791, %v296
    %v793 = vsub.f32 %v753, %v792
    %v794 = vsub.f32 %v754, %v792
    %v795 = vsub.f32 %v755, %v792
    %v796 = vsub.f32 %v756, %v792
    %v797 = vsub.f32 %v757, %v792
    %v798 = vsub.f32 %v758, %v792
    %v799 = vsub.f32 %v759, %v792
    %v800 = vsub.f32 %v760, %v792
    %v801 = vsub.f32 %v761, %v792
    %v802 = vsub.f32 %v762, %v792
    %v803 = vsub.f32 %v763, %v792
    %v804 = vsub.f32 %v764, %v792
    %v805 = vsub.f32 %v765, %v792
    %v806 = vsub.f32 %v766, %v792
    %v807 = vsub.f32 %v767, %v792
    %v808 = vsub.f32 %v768, %v792
    %v809 = vmul.f32 %v793, %v793
    %v810 = vmul.f32 %v794, %v794
    %v811 = vmul.f32 %v795, %v795
    %v812 = vmul.f32 %v796, %v796
    %v813 = vmul.f32 %v797, %v797
    %v814 = vmul.f32 %v798, %v798
    %v815 = vmul.f32 %v799, %v799
    %v816 = vmul.f32 %v800, %v800
    %v817 = vmul.f32 %v801, %v801
    %v818 = vmul.f32 %v802, %v802
    %v819 = vmul.f32 %v803, %v803
    %v820 = vmul.f32 %v804, %v804
    %v821 = vmul.f32 %v805, %v805
    %v822 = vmul.f32 %v806, %v806
    %v823 = vmul.f32 %v807, %v807
    %v824 = vmul.f32 %v808, %v808
    %v825 = vadd.f32 %v809, %v810
    %v826 = vadd.f32 %v825, %v811
    %v827 = vadd.f32 %v826, %v812
    %v828 = vadd.f32 %v827, %v813
    %v829 = vadd.f32 %v828, %v814
    %v830 = vadd.f32 %v829, %v815
    %v831 = vadd.f32 %v830, %v816
    %v832 = vadd.f32 %v831, %v817
    %v833 = vadd.f32 %v832, %v818
    %v834 = vadd.f32 %v833, %v819
    %v835 = vadd.f32 %v834, %v820
    %v836 = vadd.f32 %v835, %v821
    %v837 = vadd.f32 %v836, %v822
    %v838 = vadd.f32 %v837, %v823
    %v839 = vadd.f32 %v838, %v824
    %v840 = vrot.slane %v839, 4
    %v841 = vadd.f32 %v839, %v840
    %v842 = vrot.slane %v841, 2
    %v843 = vadd.f32 %v841, %v842
    %v844 = vrot.slane %v843, 1
    %v845 = vadd.f32 %v843, %v844
    %v846 = vmul.f32 %v845, %v296
    %v847 = vadd.f32 %v846, 1e-05
    %v848 = vrsqrt.pop %v847
    %v849 = vmul.f32 %v793, %v848
    %v850 = vmul.f32 %v794, %v848
    %v851 = vmul.f32 %v795, %v848
    %v852 = vmul.f32 %v796, %v848
    %v853 = vmul.f32 %v797, %v848
    %v854 = vmul.f32 %v798, %v848
    %v855 = vmul.f32 %v799, %v848
    %v856 = vmul.f32 %v800, %v848
    %v857 = vmul.f32 %v801, %v848
    %v858 = vmul.f32 %v802, %v848
    %v859 = vmul.f32 %v803, %v848
    %v860 = vmul.f32 %v804, %v848
    %v861 = vmul.f32 %v805, %v848
    %v862 = vmul.f32 %v806, %v848
    %v863 = vmul.f32 %v807, %v848
    %v864 = vmul.f32 %v808, %v848
    %v866 = vlaneseq
    %v867 = vshrl.u32 %v866, 7
    %v868 = vsub.s32 0, %v867
    %v869 = vrot.slane %v769, %v868
    %v871 = vmul.f32 %v849, %v869
    %v872 = vmul.f32 %v850, %v869
    %v873 = vmul.f32 %v851, %v869
    %v874 = vmul.f32 %v852, %v869
    %v875 = vmul.f32 %v853, %v869
    %v876 = vmul.f32 %v854, %v869
    %v877 = vmul.f32 %v855, %v869
    %v878 = vmul.f32 %v856, %v869
    %v879 = vmul.f32 %v857, %v869
    %v880 = vmul.f32 %v858, %v869
    %v881 = vmul.f32 %v859, %v869
    %v882 = vmul.f32 %v860, %v869
    %v883 = vmul.f32 %v861, %v869
    %v884 = vmul.f32 %v862, %v869
    %v885 = vmul.f32 %v863, %v869
    %v886 = vmul.f32 %v864, %v869
    %v888 = vlaneseq
    %v889 = vshrl.u32 %v888, 7
    %v890 = vsub.s32 0, %v889
    %v891 = vrot.slane %v770, %v890
    %v893 = vadd.f32 %v871, %v891
    %v894 = vadd.f32 %v872, %v891
    %v895 = vadd.f32 %v873, %v891
    %v896 = vadd.f32 %v874, %v891
    %v897 = vadd.f32 %v875, %v891
    %v898 = vadd.f32 %v876, %v891
    %v899 = vadd.f32 %v877, %v891
    %v900 = vadd.f32 %v878, %v891
    %v901 = vadd.f32 %v879, %v891
    %v902 = vadd.f32 %v880, %v891
    %v903 = vadd.f32 %v881, %v891
    %v904 = vadd.f32 %v882, %v891
    %v905 = vadd.f32 %v883, %v891
    %v906 = vadd.f32 %v884, %v891
    %v907 = vadd.f32 %v885, %v891
    %v908 = vadd.f32 %v886, %v891
    %v909 = vld [vmem:[#allocation2] sm:$0xff]
    %v910 = vld [vmem:[#allocation2 + $0x8] sm:$0xff]
    %v911 = vld [vmem:[#allocation2 + $0x10] sm:$0xff]
    %v912 = vld [vmem:[#allocation2 + $0x18] sm:$0xff]
    %v913 = vld [vmem:[#allocation2 + $0x20] sm:$0xff]
    %v914 = vld [vmem:[#allocation2 + $0x28] sm:$0xff]
    %v915 = vld [vmem:[#allocation2 + $0x30] sm:$0xff]
    %v916 = vld [vmem:[#allocation2 + $0x38] sm:$0xff]
    %v917 = vld [vmem:[#allocation2 + $0x40] sm:$0xff]
    %v918 = vld [vmem:[#allocation2 + $0x48] sm:$0xff]
    %v919 = vld [vmem:[#allocation2 + $0x50] sm:$0xff]
    %v920 = vld [vmem:[#allocation2 + $0x58] sm:$0xff]
    %v921 = vld [vmem:[#allocation2 + $0x60] sm:$0xff]
    %v922 = vld [vmem:[#allocation2 + $0x68] sm:$0xff]
    %v923 = vld [vmem:[#allocation2 + $0x70] sm:$0xff]
    %v924 = vld [vmem:[#allocation2 + $0x78] sm:$0xff]
    %v925 = vpack.c.bf16 %v894, %v893
    %v926 = vpack.c.bf16 %v896, %v895
    %v927 = vpack.c.bf16 %v898, %v897
    %v928 = vpack.c.bf16 %v900, %v899
    %v929 = vpack.c.bf16 %v902, %v901
    %v930 = vpack.c.bf16 %v904, %v903
    %v931 = vpack.c.bf16 %v906, %v905
    %v932 = vpack.c.bf16 %v908, %v907
    %v933 = vpack.c.bf16 %v910, %v909
    %v934 = vpack.c.bf16 %v912, %v911
    %v935 = vpack.c.bf16 %v914, %v913
    %v936 = vpack.c.bf16 %v916, %v915
    %v937 = vpack.c.bf16 %v918, %v917
    %v938 = vpack.c.bf16 %v920, %v919
    %v939 = vpack.c.bf16 %v922, %v921
    %v940 = vpack.c.bf16 %v924, %v923
    %v941 = vld [vmem:[%s6] sm:$0x1]
    %v943 = vlaneseq
    %v944 = vshrl.u32 %v943, 7
    %v945 = vsub.s32 0, %v944
    %v946 = vrot.slane %v941, %v945
    %948 = vmatprep.subr.bf16.mxu0 0
    %949 = vmatpush1.bf16.msra.mxu0 %v940
    %950 = vmatprep.subr.bf16.mxu0 0
    %951 = vmatpush1.bf16.msra.mxu0 %v939
    %952 = vmatprep.subr.bf16.mxu0 0
    %953 = vmatpush1.bf16.msra.mxu0 %v938
    %954 = vmatprep.subr.bf16.mxu0 0
    %955 = vmatpush1.bf16.msra.mxu0 %v937
    %956 = vmatprep.subr.bf16.mxu0 0
    %957 = vmatpush1.bf16.msra.mxu0 %v936
    %958 = vmatprep.subr.bf16.mxu0 0
    %959 = vmatpush1.bf16.msra.mxu0 %v935
    %960 = vmatprep.subr.bf16.mxu0 0
    %961 = vmatpush1.bf16.msra.mxu0 %v934
    %962 = vmatprep.subr.bf16.mxu0 0
    %963 = vmatpush1.bf16.msra.mxu0 %v933
    %964 = vmatprep.subr.bf16.mxu0 0
    %965 = vmatpush2.bf16.msra.mxu0 0
    %966 = vmatprep.subr.bf16.mxu0 0
    %967 = vmatpush2.bf16.msra.mxu0 0
    %968 = vmatprep.subr.bf16.mxu0 0
    %969 = vmatpush2.bf16.msra.mxu0 0
    %970 = vmatprep.subr.bf16.mxu0 0
    %971 = vmatpush2.bf16.msra.mxu0 0
    %972 = vmatprep.subr.bf16.mxu0 0
    %973 = vmatpush2.bf16.msra.mxu0 0
    %974 = vmatprep.subr.bf16.mxu0 0
    %975 = vmatpush2.bf16.msra.mxu0 0
    %976 = vmatprep.subr.bf16.mxu0 0
    %977 = vmatpush2.bf16.msra.mxu0 0
    %978 = vmatprep.subr.bf16.mxu0 0
    %979 = vmatpush2.bf16.msra.mxu0 0
    %980 = vmatprep.mubr.bf16.mxu0 0
    %981 = vmatmul.mubr.bf16.gmra.mxu0 %v925
    %v982 = vpop.f32.mrf.mxu0
    %v983 = vadd.f32 %v946, %v982
    %v984 = vpop.f32.mrf.mxu0
    %v985 = vpop.f32.mrf.mxu0
    %v986 = vadd.f32 %v946, %v985
    %v987 = vpop.f32.mrf.mxu0
    %988 = vmatprep.mubr.bf16.mxu0 0
    %989 = vmatmul.mubr.bf16.gmra.mxu0 %v926
    %v990 = vpop.f32.mrf.mxu0
    %v991 = vadd.f32 %v946, %v990
    %v992 = vpop.f32.mrf.mxu0
    %v993 = vpop.f32.mrf.mxu0
    %v994 = vadd.f32 %v946, %v993
    %v995 = vpop.f32.mrf.mxu0
    %996 = vmatprep.mubr.bf16.mxu0 0
    %997 = vmatmul.mubr.bf16.gmra.mxu0 %v927
    %v998 = vpop.f32.mrf.mxu0
    %v999 = vadd.f32 %v946, %v998
    %v1000 = vpop.f32.mrf.mxu0
    %v1001 = vpop.f32.mrf.mxu0
    %v1002 = vadd.f32 %v946, %v1001
    %v1003 = vpop.f32.mrf.mxu0
    %1004 = vmatprep.mubr.bf16.mxu0 0
    %1005 = vmatmul.mubr.bf16.gmra.mxu0 %v928
    %v1006 = vpop.f32.mrf.mxu0
    %v1007 = vadd.f32 %v946, %v1006
    %v1008 = vpop.f32.mrf.mxu0
    %v1009 = vpop.f32.mrf.mxu0
    %v1010 = vadd.f32 %v946, %v1009
    %v1011 = vpop.f32.mrf.mxu0
    %1012 = vmatprep.mubr.bf16.mxu0 0
    %1013 = vmatmul.mubr.bf16.gmra.mxu0 %v929
    %v1014 = vpop.f32.mrf.mxu0
    %v1015 = vadd.f32 %v946, %v1014
    %v1016 = vpop.f32.mrf.mxu0
    %v1017 = vpop.f32.mrf.mxu0
    %v1018 = vadd.f32 %v946, %v1017
    %v1019 = vpop.f32.mrf.mxu0
    %1020 = vmatprep.mubr.bf16.mxu0 0
    %1021 = vmatmul.mubr.bf16.gmra.mxu0 %v930
    %v1022 = vpop.f32.mrf.mxu0
    %v1023 = vadd.f32 %v946, %v1022
    %v1024 = vpop.f32.mrf.mxu0
    %v1025 = vpop.f32.mrf.mxu0
    %v1026 = vadd.f32 %v946, %v1025
    %v1027 = vpop.f32.mrf.mxu0
    %1028 = vmatprep.mubr.bf16.mxu0 0
    %1029 = vmatmul.mubr.bf16.gmra.mxu0 %v931
    %v1030 = vpop.f32.mrf.mxu0
    %v1031 = vadd.f32 %v946, %v1030
    %v1032 = vpop.f32.mrf.mxu0
    %v1033 = vpop.f32.mrf.mxu0
    %v1034 = vadd.f32 %v946, %v1033
    %v1035 = vpop.f32.mrf.mxu0
    %1036 = vmatprep.mubr.bf16.mxu0 0
    %1037 = vmatmul.mubr.bf16.gmra.mxu0 %v932
    %v1038 = vpop.f32.mrf.mxu0
    %v1039 = vadd.f32 %v946, %v1038
    %v1040 = vpop.f32.mrf.mxu0
    %v1041 = vpop.f32.mrf.mxu0
    %v1042 = vadd.f32 %v946, %v1041
    %v1043 = vpop.f32.mrf.mxu0
    %1044 = vdwg.mxu0
    %v1045 = vadd.f32 %v983, %v986
    %v1046 = vadd.f32 %v1045, %v991
    %v1047 = vadd.f32 %v1046, %v994
    %v1048 = vadd.f32 %v1047, %v999
    %v1049 = vadd.f32 %v1048, %v1002
    %v1050 = vadd.f32 %v1049, %v1007
    %v1051 = vadd.f32 %v1050, %v1010
    %v1052 = vadd.f32 %v1051, %v1015
    %v1053 = vadd.f32 %v1052, %v1018
    %v1054 = vadd.f32 %v1053, %v1023
    %v1055 = vadd.f32 %v1054, %v1026
    %v1056 = vadd.f32 %v1055, %v1031
    %v1057 = vadd.f32 %v1056, %v1034
    %v1058 = vadd.f32 %v1057, %v1039
    %v1059 = vadd.f32 %v1058, %v1042
    %v1060 = vrot.slane %v1059, 4
    %v1061 = vadd.f32 %v1059, %v1060
    %v1062 = vrot.slane %v1061, 2
    %v1063 = vadd.f32 %v1061, %v1062
    %v1064 = vrot.slane %v1063, 1
    %v1065 = vadd.f32 %v1063, %v1064
    %v1066 = vmul.f32 %v1065, %v296
    %v1067 = vsub.f32 %v983, %v1066
    %v1068 = vsub.f32 %v986, %v1066
    %v1069 = vsub.f32 %v991, %v1066
    %v1070 = vsub.f32 %v994, %v1066
    %v1071 = vsub.f32 %v999, %v1066
    %v1072 = vsub.f32 %v1002, %v1066
    %v1073 = vsub.f32 %v1007, %v1066
    %v1074 = vsub.f32 %v1010, %v1066
    %v1075 = vsub.f32 %v1015, %v1066
    %v1076 = vsub.f32 %v1018, %v1066
    %v1077 = vsub.f32 %v1023, %v1066
    %v1078 = vsub.f32 %v1026, %v1066
    %v1079 = vsub.f32 %v1031, %v1066
    %v1080 = vsub.f32 %v1034, %v1066
    %v1081 = vsub.f32 %v1039, %v1066
    %v1082 = vsub.f32 %v1042, %v1066
    %v1083 = vmul.f32 %v1067, %v1067
    %v1084 = vmul.f32 %v1068, %v1068
    %v1085 = vmul.f32 %v1069, %v1069
    %v1086 = vmul.f32 %v1070, %v1070
    %v1087 = vmul.f32 %v1071, %v1071
    %v1088 = vmul.f32 %v1072, %v1072
    %v1089 = vmul.f32 %v1073, %v1073
    %v1090 = vmul.f32 %v1074, %v1074
    %v1091 = vmul.f32 %v1075, %v1075
    %v1092 = vmul.f32 %v1076, %v1076
    %v1093 = vmul.f32 %v1077, %v1077
    %v1094 = vmul.f32 %v1078, %v1078
    %v1095 = vmul.f32 %v1079, %v1079
    %v1096 = vmul.f32 %v1080, %v1080
    %v1097 = vmul.f32 %v1081, %v1081
    %v1098 = vmul.f32 %v1082, %v1082
    %v1099 = vadd.f32 %v1083, %v1084
    %v1100 = vadd.f32 %v1099, %v1085
    %v1101 = vadd.f32 %v1100, %v1086
    %v1102 = vadd.f32 %v1101, %v1087
    %v1103 = vadd.f32 %v1102, %v1088
    %v1104 = vadd.f32 %v1103, %v1089
    %v1105 = vadd.f32 %v1104, %v1090
    %v1106 = vadd.f32 %v1105, %v1091
    %v1107 = vadd.f32 %v1106, %v1092
    %v1108 = vadd.f32 %v1107, %v1093
    %v1109 = vadd.f32 %v1108, %v1094
    %v1110 = vadd.f32 %v1109, %v1095
    %v1111 = vadd.f32 %v1110, %v1096
    %v1112 = vadd.f32 %v1111, %v1097
    %v1113 = vadd.f32 %v1112, %v1098
    %v1114 = vrot.slane %v1113, 4
    %v1115 = vadd.f32 %v1113, %v1114
    %v1116 = vrot.slane %v1115, 2
    %v1117 = vadd.f32 %v1115, %v1116
    %v1118 = vrot.slane %v1117, 1
    %v1119 = vadd.f32 %v1117, %v1118
    %v1120 = vmul.f32 %v1119, %v296
    %v1121 = vadd.f32 %v1120, 1e-05
    %v1122 = vrsqrt.pop %v1121
    %v1123 = vmul.f32 %v1067, %v1122
    %v1124 = vmul.f32 %v1068, %v1122
    %v1125 = vmul.f32 %v1069, %v1122
    %v1126 = vmul.f32 %v1070, %v1122
    %v1127 = vmul.f32 %v1071, %v1122
    %v1128 = vmul.f32 %v1072, %v1122
    %v1129 = vmul.f32 %v1073, %v1122
    %v1130 = vmul.f32 %v1074, %v1122
    %v1131 = vmul.f32 %v1075, %v1122
    %v1132 = vmul.f32 %v1076, %v1122
    %v1133 = vmul.f32 %v1077, %v1122
    %v1134 = vmul.f32 %v1078, %v1122
    %v1135 = vmul.f32 %v1079, %v1122
    %v1136 = vmul.f32 %v1080, %v1122
    %v1137 = vmul.f32 %v1081, %v1122
    %v1138 = vmul.f32 %v1082, %v1122
    %v1139 = vmul.f32 %v1123, %v869
    %v1140 = vmul.f32 %v1124, %v869
    %v1141 = vmul.f32 %v1125, %v869
    %v1142 = vmul.f32 %v1126, %v869
    %v1143 = vmul.f32 %v1127, %v869
    %v1144 = vmul.f32 %v1128, %v869
    %v1145 = vmul.f32 %v1129, %v869
    %v1146 = vmul.f32 %v1130, %v869
    %v1147 = vmul.f32 %v1131, %v869
    %v1148 = vmul.f32 %v1132, %v869
    %v1149 = vmul.f32 %v1133, %v869
    %v1150 = vmul.f32 %v1134, %v869
    %v1151 = vmul.f32 %v1135, %v869
    %v1152 = vmul.f32 %v1136, %v869
    %v1153 = vmul.f32 %v1137, %v869
    %v1154 = vmul.f32 %v1138, %v869
    %v1155 = vadd.f32 %v1139, %v891
    %v1156 = vadd.f32 %v1140, %v891
    %v1157 = vadd.f32 %v1141, %v891
    %v1158 = vadd.f32 %v1142, %v891
    %v1159 = vadd.f32 %v1143, %v891
    %v1160 = vadd.f32 %v1144, %v891
    %v1161 = vadd.f32 %v1145, %v891
    %v1162 = vadd.f32 %v1146, %v891
    %v1163 = vadd.f32 %v1147, %v891
    %v1164 = vadd.f32 %v1148, %v891
    %v1165 = vadd.f32 %v1149, %v891
    %v1166 = vadd.f32 %v1150, %v891
    %v1167 = vadd.f32 %v1151, %v891
    %v1168 = vadd.f32 %v1152, %v891
    %v1169 = vadd.f32 %v1153, %v891
    %v1170 = vadd.f32 %v1154, %v891
    %vm1171 = vcmp.gt.f32.partialorder %v1155, 20.0
    %vm1172 = vcmp.gt.f32.partialorder %v1156, 20.0
    %vm1173 = vcmp.gt.f32.partialorder %v1157, 20.0
    %vm1174 = vcmp.gt.f32.partialorder %v1158, 20.0
    %vm1175 = vcmp.gt.f32.partialorder %v1159, 20.0
    %vm1176 = vcmp.gt.f32.partialorder %v1160, 20.0
    %vm1177 = vcmp.gt.f32.partialorder %v1161, 20.0
    %vm1178 = vcmp.gt.f32.partialorder %v1162, 20.0
    %vm1179 = vcmp.gt.f32.partialorder %v1163, 20.0
    %vm1180 = vcmp.gt.f32.partialorder %v1164, 20.0
    %vm1181 = vcmp.gt.f32.partialorder %v1165, 20.0
    %vm1182 = vcmp.gt.f32.partialorder %v1166, 20.0
    %vm1183 = vcmp.gt.f32.partialorder %v1167, 20.0
    %vm1184 = vcmp.gt.f32.partialorder %v1168, 20.0
    %vm1185 = vcmp.gt.f32.partialorder %v1169, 20.0
    %vm1186 = vcmp.gt.f32.partialorder %v1170, 20.0
    %v1187 = vmin.f32 %v1155, 20.0
    %v1188 = vmin.f32 %v1156, 20.0
    %v1189 = vmin.f32 %v1157, 20.0
    %v1190 = vmin.f32 %v1158, 20.0
    %v1191 = vmin.f32 %v1159, 20.0
    %v1192 = vmin.f32 %v1160, 20.0
    %v1193 = vmin.f32 %v1161, 20.0
    %v1194 = vmin.f32 %v1162, 20.0
    %v1195 = vmin.f32 %v1163, 20.0
    %v1196 = vmin.f32 %v1164, 20.0
    %v1197 = vmin.f32 %v1165, 20.0
    %v1198 = vmin.f32 %v1166, 20.0
    %v1199 = vmin.f32 %v1167, 20.0
    %v1200 = vmin.f32 %v1168, 20.0
    %v1201 = vmin.f32 %v1169, 20.0
    %v1202 = vmin.f32 %v1170, 20.0
    %v1203 = vmul.f32 %v1187, 1.442695
    %v1204 = vpow.pop %v1203
    %v1205 = vmul.f32 %v1188, 1.442695
    %v1206 = vpow.pop %v1205
    %v1207 = vmul.f32 %v1189, 1.442695
    %v1208 = vpow.pop %v1207
    %v1209 = vmul.f32 %v1190, 1.442695
    %v1210 = vpow.pop %v1209
    %v1211 = vmul.f32 %v1191, 1.442695
    %v1212 = vpow.pop %v1211
    %v1213 = vmul.f32 %v1192, 1.442695
    %v1214 = vpow.pop %v1213
    %v1215 = vmul.f32 %v1193, 1.442695
    %v1216 = vpow.pop %v1215
    %v1217 = vmul.f32 %v1194, 1.442695
    %v1218 = vpow.pop %v1217
    %v1219 = vmul.f32 %v1195, 1.442695
    %v1220 = vpow.pop %v1219
    %v1221 = vmul.f32 %v1196, 1.442695
    %v1222 = vpow.pop %v1221
    %v1223 = vmul.f32 %v1197, 1.442695
    %v1224 = vpow.pop %v1223
    %v1225 = vmul.f32 %v1198, 1.442695
    %v1226 = vpow.pop %v1225
    %v1227 = vmul.f32 %v1199, 1.442695
    %v1228 = vpow.pop %v1227
    %v1229 = vmul.f32 %v1200, 1.442695
    %v1230 = vpow.pop %v1229
    %v1231 = vmul.f32 %v1201, 1.442695
    %v1232 = vpow.pop %v1231
    %v1233 = vmul.f32 %v1202, 1.442695
    %v1234 = vpow.pop %v1233
    %v1235 = vadd.f32 %v1204, 1.0
    %v1236 = vadd.f32 %v1206, 1.0
    %v1237 = vadd.f32 %v1208, 1.0
    %v1238 = vadd.f32 %v1210, 1.0
    %v1239 = vadd.f32 %v1212, 1.0
    %v1240 = vadd.f32 %v1214, 1.0
    %v1241 = vadd.f32 %v1216, 1.0
    %v1242 = vadd.f32 %v1218, 1.0
    %v1243 = vadd.f32 %v1220, 1.0
    %v1244 = vadd.f32 %v1222, 1.0
    %v1245 = vadd.f32 %v1224, 1.0
    %v1246 = vadd.f32 %v1226, 1.0
    %v1247 = vadd.f32 %v1228, 1.0
    %v1248 = vadd.f32 %v1230, 1.0
    %v1249 = vadd.f32 %v1232, 1.0
    %v1250 = vadd.f32 %v1234, 1.0
    %v1251 = vlog2.pop %v1235
    %v1252 = vmul.f32 %v1251, 0.6931472
    %v1253 = vlog2.pop %v1236
    %v1254 = vmul.f32 %v1253, 0.6931472
    %v1255 = vlog2.pop %v1237
    %v1256 = vmul.f32 %v1255, 0.6931472
    %v1257 = vlog2.pop %v1238
    %v1258 = vmul.f32 %v1257, 0.6931472
    %v1259 = vlog2.pop %v1239
    %v1260 = vmul.f32 %v1259, 0.6931472
    %v1261 = vlog2.pop %v1240
    %v1262 = vmul.f32 %v1261, 0.6931472
    %v1263 = vlog2.pop %v1241
    %v1264 = vmul.f32 %v1263, 0.6931472
    %v1265 = vlog2.pop %v1242
    %v1266 = vmul.f32 %v1265, 0.6931472
    %v1267 = vlog2.pop %v1243
    %v1268 = vmul.f32 %v1267, 0.6931472
    %v1269 = vlog2.pop %v1244
    %v1270 = vmul.f32 %v1269, 0.6931472
    %v1271 = vlog2.pop %v1245
    %v1272 = vmul.f32 %v1271, 0.6931472
    %v1273 = vlog2.pop %v1246
    %v1274 = vmul.f32 %v1273, 0.6931472
    %v1275 = vlog2.pop %v1247
    %v1276 = vmul.f32 %v1275, 0.6931472
    %v1277 = vlog2.pop %v1248
    %v1278 = vmul.f32 %v1277, 0.6931472
    %v1279 = vlog2.pop %v1249
    %v1280 = vmul.f32 %v1279, 0.6931472
    %v1281 = vlog2.pop %v1250
    %v1282 = vmul.f32 %v1281, 0.6931472
    %v1283 = vsel %vm1171, %v1155, %v1252
    %v1284 = vsel %vm1172, %v1156, %v1254
    %v1285 = vsel %vm1173, %v1157, %v1256
    %v1286 = vsel %vm1174, %v1158, %v1258
    %v1287 = vsel %vm1175, %v1159, %v1260
    %v1288 = vsel %vm1176, %v1160, %v1262
    %v1289 = vsel %vm1177, %v1161, %v1264
    %v1290 = vsel %vm1178, %v1162, %v1266
    %v1291 = vsel %vm1179, %v1163, %v1268
    %v1292 = vsel %vm1180, %v1164, %v1270
    %v1293 = vsel %vm1181, %v1165, %v1272
    %v1294 = vsel %vm1182, %v1166, %v1274
    %v1295 = vsel %vm1183, %v1167, %v1276
    %v1296 = vsel %vm1184, %v1168, %v1278
    %v1297 = vsel %vm1185, %v1169, %v1280
    %v1298 = vsel %vm1186, %v1170, %v1282
    %v1299 = vld [vmem:[%s9] sm:$0x1]
    %v1300 = vld [vmem:[%s10] sm:$0x1]
    %v1301 = vadd.f32 %v1283, %v1284
    %v1302 = vadd.f32 %v1301, %v1285
    %v1303 = vadd.f32 %v1302, %v1286
    %v1304 = vadd.f32 %v1303, %v1287
    %v1305 = vadd.f32 %v1304, %v1288
    %v1306 = vadd.f32 %v1305, %v1289
    %v1307 = vadd.f32 %v1306, %v1290
    %v1308 = vadd.f32 %v1307, %v1291
    %v1309 = vadd.f32 %v1308, %v1292
    %v1310 = vadd.f32 %v1309, %v1293
    %v1311 = vadd.f32 %v1310, %v1294
    %v1312 = vadd.f32 %v1311, %v1295
    %v1313 = vadd.f32 %v1312, %v1296
    %v1314 = vadd.f32 %v1313, %v1297
    %v1315 = vadd.f32 %v1314, %v1298
    %v1316 = vrot.slane %v1315, 4
    %v1317 = vadd.f32 %v1315, %v1316
    %v1318 = vrot.slane %v1317, 2
    %v1319 = vadd.f32 %v1317, %v1318
    %v1320 = vrot.slane %v1319, 1
    %v1321 = vadd.f32 %v1319, %v1320
    %v1322 = vmul.f32 %v1321, %v296
    %v1323 = vsub.f32 %v1283, %v1322
    %v1324 = vsub.f32 %v1284, %v1322
    %v1325 = vsub.f32 %v1285, %v1322
    %v1326 = vsub.f32 %v1286, %v1322
    %v1327 = vsub.f32 %v1287, %v1322
    %v1328 = vsub.f32 %v1288, %v1322
    %v1329 = vsub.f32 %v1289, %v1322
    %v1330 = vsub.f32 %v1290, %v1322
    %v1331 = vsub.f32 %v1291, %v1322
    %v1332 = vsub.f32 %v1292, %v1322
    %v1333 = vsub.f32 %v1293, %v1322
    %v1334 = vsub.f32 %v1294, %v1322
    %v1335 = vsub.f32 %v1295, %v1322
    %v1336 = vsub.f32 %v1296, %v1322
    %v1337 = vsub.f32 %v1297, %v1322
    %v1338 = vsub.f32 %v1298, %v1322
    %v1339 = vmul.f32 %v1323, %v1323
    %v1340 = vmul.f32 %v1324, %v1324
    %v1341 = vmul.f32 %v1325, %v1325
    %v1342 = vmul.f32 %v1326, %v1326
    %v1343 = vmul.f32 %v1327, %v1327
    %v1344 = vmul.f32 %v1328, %v1328
    %v1345 = vmul.f32 %v1329, %v1329
    %v1346 = vmul.f32 %v1330, %v1330
    %v1347 = vmul.f32 %v1331, %v1331
    %v1348 = vmul.f32 %v1332, %v1332
    %v1349 = vmul.f32 %v1333, %v1333
    %v1350 = vmul.f32 %v1334, %v1334
    %v1351 = vmul.f32 %v1335, %v1335
    %v1352 = vmul.f32 %v1336, %v1336
    %v1353 = vmul.f32 %v1337, %v1337
    %v1354 = vmul.f32 %v1338, %v1338
    %v1355 = vadd.f32 %v1339, %v1340
    %v1356 = vadd.f32 %v1355, %v1341
    %v1357 = vadd.f32 %v1356, %v1342
    %v1358 = vadd.f32 %v1357, %v1343
    %v1359 = vadd.f32 %v1358, %v1344
    %v1360 = vadd.f32 %v1359, %v1345
    %v1361 = vadd.f32 %v1360, %v1346
    %v1362 = vadd.f32 %v1361, %v1347
    %v1363 = vadd.f32 %v1362, %v1348
    %v1364 = vadd.f32 %v1363, %v1349
    %v1365 = vadd.f32 %v1364, %v1350
    %v1366 = vadd.f32 %v1365, %v1351
    %v1367 = vadd.f32 %v1366, %v1352
    %v1368 = vadd.f32 %v1367, %v1353
    %v1369 = vadd.f32 %v1368, %v1354
    %v1370 = vrot.slane %v1369, 4
    %v1371 = vadd.f32 %v1369, %v1370
    %v1372 = vrot.slane %v1371, 2
    %v1373 = vadd.f32 %v1371, %v1372
    %v1374 = vrot.slane %v1373, 1
    %v1375 = vadd.f32 %v1373, %v1374
    %v1376 = vmul.f32 %v1375, %v296
    %v1377 = vadd.f32 %v1376, 1e-05
    %v1378 = vrsqrt.pop %v1377
    %v1379 = vmul.f32 %v1323, %v1378
    %v1380 = vmul.f32 %v1324, %v1378
    %v1381 = vmul.f32 %v1325, %v1378
    %v1382 = vmul.f32 %v1326, %v1378
    %v1383 = vmul.f32 %v1327, %v1378
    %v1384 = vmul.f32 %v1328, %v1378
    %v1385 = vmul.f32 %v1329, %v1378
    %v1386 = vmul.f32 %v1330, %v1378
    %v1387 = vmul.f32 %v1331, %v1378
    %v1388 = vmul.f32 %v1332, %v1378
    %v1389 = vmul.f32 %v1333, %v1378
    %v1390 = vmul.f32 %v1334, %v1378
    %v1391 = vmul.f32 %v1335, %v1378
    %v1392 = vmul.f32 %v1336, %v1378
    %v1393 = vmul.f32 %v1337, %v1378
    %v1394 = vmul.f32 %v1338, %v1378
    %v1396 = vlaneseq
    %v1397 = vshrl.u32 %v1396, 7
    %v1398 = vsub.s32 0, %v1397
    %v1399 = vrot.slane %v1299, %v1398
    %v1401 = vmul.f32 %v1379, %v1399
    %v1402 = vmul.f32 %v1380, %v1399
    %v1403 = vmul.f32 %v1381, %v1399
    %v1404 = vmul.f32 %v1382, %v1399
    %v1405 = vmul.f32 %v1383, %v1399
    %v1406 = vmul.f32 %v1384, %v1399
    %v1407 = vmul.f32 %v1385, %v1399
    %v1408 = vmul.f32 %v1386, %v1399
    %v1409 = vmul.f32 %v1387, %v1399
    %v1410 = vmul.f32 %v1388, %v1399
    %v1411 = vmul.f32 %v1389, %v1399
    %v1412 = vmul.f32 %v1390, %v1399
    %v1413 = vmul.f32 %v1391, %v1399
    %v1414 = vmul.f32 %v1392, %v1399
    %v1415 = vmul.f32 %v1393, %v1399
    %v1416 = vmul.f32 %v1394, %v1399
    %v1418 = vlaneseq
    %v1419 = vshrl.u32 %v1418, 7
    %v1420 = vsub.s32 0, %v1419
    %v1421 = vrot.slane %v1300, %v1420
    %v1423 = vadd.f32 %v1401, %v1421
    %v1424 = vadd.f32 %v1402, %v1421
    %v1425 = vadd.f32 %v1403, %v1421
    %v1426 = vadd.f32 %v1404, %v1421
    %v1427 = vadd.f32 %v1405, %v1421
    %v1428 = vadd.f32 %v1406, %v1421
    %v1429 = vadd.f32 %v1407, %v1421
    %v1430 = vadd.f32 %v1408, %v1421
    %v1431 = vadd.f32 %v1409, %v1421
    %v1432 = vadd.f32 %v1410, %v1421
    %v1433 = vadd.f32 %v1411, %v1421
    %v1434 = vadd.f32 %v1412, %v1421
    %v1435 = vadd.f32 %v1413, %v1421
    %v1436 = vadd.f32 %v1414, %v1421
    %v1437 = vadd.f32 %v1415, %v1421
    %v1438 = vadd.f32 %v1416, %v1421
    %1439 = vst [vmem:[#allocation5] sm:$0xff] %v1423
    %1440 = vst [vmem:[#allocation5 + $0x8] sm:$0xff] %v1424
    %1441 = vst [vmem:[#allocation5 + $0x10] sm:$0xff] %v1425
    %1442 = vst [vmem:[#allocation5 + $0x18] sm:$0xff] %v1426
    %1443 = vst [vmem:[#allocation5 + $0x20] sm:$0xff] %v1427
    %1444 = vst [vmem:[#allocation5 + $0x28] sm:$0xff] %v1428
    %1445 = vst [vmem:[#allocation5 + $0x30] sm:$0xff] %v1429
    %1446 = vst [vmem:[#allocation5 + $0x38] sm:$0xff] %v1430
    %1447 = vst [vmem:[#allocation5 + $0x40] sm:$0xff] %v1431
    %1448 = vst [vmem:[#allocation5 + $0x48] sm:$0xff] %v1432
    %1449 = vst [vmem:[#allocation5 + $0x50] sm:$0xff] %v1433
    %1450 = vst [vmem:[#allocation5 + $0x58] sm:$0xff] %v1434
    %1451 = vst [vmem:[#allocation5 + $0x60] sm:$0xff] %v1435
    %1452 = vst [vmem:[#allocation5 + $0x68] sm:$0xff] %v1436
    %1453 = vst [vmem:[#allocation5 + $0x70] sm:$0xff] %v1437
    %1454 = vst [vmem:[#allocation5 + $0x78] sm:$0xff] %v1438
    // Predicated region
    $region50: #{tpu_custom_call.1} parent=1 // pred_check
      _
    $region51: #{tpu_custom_call.1} parent=1 // pred_check_branch
      %1456 = sbr.rel (0) target = $region53
    $region52: #{tpu_custom_call.1} parent=1 // pred_region
      %s1458 = ssub.s32 2048, 2048
      %1459 = vsyncadd [#allocation4], %s1458
      %s1460 = sshll.u32 [#allocation5], 4
      %s1461 = int_to_ptr.vmem [resolvable:$true] %s1460
      %1466 = dma.vmem_to_hbm [thread:$0]  %s1461, 2048, %s11, [#allocation4], 128, 128, 8
    $region53: #{tpu_custom_call.1} parent=1 // pred_fallthru
      _
    // Predicated region
    $region54: #{tpu_custom_call.1} parent=1 // pred_check
      _
    $region55: #{tpu_custom_call.1} parent=1 // pred_check_branch
      %1468 = sbr.rel (0) target = $region57
    $region56: #{tpu_custom_call.1} parent=1 // pred_region
      %1469 = dma.done [#allocation4], 2048
    $region57: #{tpu_custom_call.1} parent=1 // pred_fallthru
      _
    %1470 = vsyncpa [#allocation3], 1
    %1471 = vsyncpa [#allocation4], 1

</llo_original>
